<compile_context>
chip_gen: v5e
topology: v5e:2x2
jax: 0.10.0
libtpu: 0.0.40
codegen_flags: <defaults>
</compile_context>

<pallas_src>
import jax
import jax.numpy as jnp
from jax.experimental import pallas as pl
from jax.experimental.pallas import tpu as pltpu


# Packed feature-major output rows:
#   0..NF-1 : thetas = [1, u, u^2, u^3]
#   NF      : time_derivs du/dt
#   NF+1    : output_nn = theta @ coeffs
_NF = 4
_N_OUT_ROWS = _NF + 2


# ----------------------------------------------------------------------------
# Pallas kernel: full CompleteNetwork forward for one lane-tile of N samples.
# ----------------------------------------------------------------------------
def complete_network_kernel(
    scal_ref,  # SMEM (1+NF,): [b3, c0, c1, c2, c3]
    t_ref,     # (1, TN)   time samples (lane axis = samples)
    w1_ref,    # (H, 1)    func_approx layer-1 weight (out, in)
    b1_ref,    # (H, 1)
    w2_ref,    # (H, H)    layer-2 weight (out, in)
    b2_ref,    # (H, 1)
    w3_ref,    # (H, 1)    output-layer weight, stored as a column
    fm_ref,    # (NF+2, TN) packed output: [1, u, u2, u3, du, out_nn]
):
    h = w1_ref.shape[0]
    tn = t_ref.shape[1]

    t = t_ref[...]
    w1 = w1_ref[...]
    b1 = b1_ref[...]
    w2 = w2_ref[...]
    b2 = b2_ref[...]
    w3 = w3_ref[...]
    b3 = scal_ref[0]
    c0 = scal_ref[1]
    c1 = scal_ref[2]
    c2 = scal_ref[3]
    c3 = scal_ref[4]

    # ---- layer 1 (in_features = 1): VPU broadcast multiply.
    # Hoist the (H,1)->(H,TN) lane broadcast once (JAX does not CSE it).
    w1b = jnp.broadcast_to(w1, (h, tn))
    h1 = jnp.tanh(w1b * t + b1)                  # (H, TN)
    dh1 = (1.0 - h1 * h1) * w1b                  # d h1/dt  (dt/dt = 1)

    # ---- layer 2: two back-to-back MXU dots sharing the same (H,H) weight;
    # no (H, 2TN) concatenated temporary through the store slot.
    z2 = jnp.dot(w2, h1, preferred_element_type=jnp.float32)    # (H, TN)
    dz2 = jnp.dot(w2, dh1, preferred_element_type=jnp.float32)  # (H, TN)
    h2 = jnp.tanh(z2 + b2)
    dh2 = (1.0 - h2 * h2) * dz2

    # ---- output layer (out_features = 1): off the MXU.
    # VPU multiply + sublane (XLU) reduce instead of an M=1, K=H matmul.
    u = jnp.sum(h2 * w3, axis=0, keepdims=True) + b3            # (1, TN)
    du = jnp.sum(dh2 * w3, axis=0, keepdims=True)               # (1, TN)

    u2 = u * u
    u3 = u2 * u

    # estimated_coeffs (K=4, N=1 matmul) -> VPU epilogue with SMEM scalars
    out_nn = c0 + c1 * u + c2 * u2 + c3 * u3

    # single unmasked lane-dense store of all outputs
    fm_ref[...] = jnp.concatenate(
        [jnp.ones_like(u), u, u2, u3, du, out_nn], axis=0)      # (NF+2, TN)


# ----------------------------------------------------------------------------
# Tiling helpers
# ----------------------------------------------------------------------------
def _num_tensorcores():
    """2 TensorCores per chip on v7x; v5e/v6e have 1 (grid is a serial loop)."""
    try:
        kind = jax.devices()[0].device_kind.lower()
    except Exception:
        return 1
    return 2 if "v7" in kind else 1


def _pick_tile(n, h, nf, num_tc, vmem_budget_bytes=12 << 20, hard_cap=16384):
    """Largest lane-aligned tile (multiple of 128) dividing n.

    Single-TC parts (v5e/v6e): prefer one full block (grid of 1 step) -- extra
    steps are pure pipeline overhead.  v7x: prefer exactly num_tc large steps
    so both TensorCores get work.  Capped by a conservative VMEM budget
    (safe under v5e's 16 MiB scoped default and v7x's 64 MiB physical VMEM).

    N < 128 or not a multiple of 128 returns n unchanged: legal (full-array
    lane dim) but stores become lane-masked -- a perf cliff, not a bug.
    """
    if n < 128 or n % 128 != 0:
        return n
    # rough f32 per-lane footprint: streamed in/out blocks (double-buffered)
    # + the six (H, TN) in-kernel intermediates (h1, dh1, z2, dz2, h2, dh2)
    per_lane_bytes = 4 * (2 * (1 + (nf + 2)) + 6 * h)
    cap = min(hard_cap, n, vmem_budget_bytes // per_lane_bytes)
    if num_tc >= 2:
        cap = min(cap, max(128, n // num_tc))
    cap = max(128, (cap // 128) * 128)
    tn = 128
    for c in range(128, cap + 1, 128):
        if n % c == 0:
            tn = c
    return tn


# ----------------------------------------------------------------------------
# pallas_call construction
# ----------------------------------------------------------------------------
def _build_call(n, tn, h, nf, single_buffer_weights):
    lane_row = pl.BlockSpec((1, tn), lambda i: (0, i))
    fm_spec = pl.BlockSpec((nf + 2, tn), lambda i: (0, i))

    if single_buffer_weights:
        def const(shape):
            # constant block index -> resident in VMEM; single buffer is enough
            return pl.BlockSpec(shape, lambda i: (0, 0),
                                pipeline_mode=pl.Buffered(1))
    else:
        def const(shape):
            return pl.BlockSpec(shape, lambda i: (0, 0))

    grid_spec = pltpu.PrefetchScalarGridSpec(
        num_scalar_prefetch=0,
        grid=(n // tn,),
        in_specs=[
            pl.BlockSpec(memory_space=pltpu.MemorySpace.SMEM),  # scalars
            lane_row,          # t
            const((h, 1)),     # w1
            const((h, 1)),     # b1
            const((h, h)),     # w2
            const((h, 1)),     # b2
            const((h, 1)),     # w3 (column)
        ],
        out_specs=fm_spec,
    )

    return pl.pallas_call(
        complete_network_kernel,
        out_shape=jax.ShapeDtypeStruct((nf + 2, n), jnp.float32),
        grid_spec=grid_spec,
        compiler_params=pltpu.CompilerParams(
            dimension_semantics=("parallel",)),
    )


# ----------------------------------------------------------------------------
# Wrapper (external API stays sample-major, like the PyTorch module)
# ----------------------------------------------------------------------------
def complete_network(t, params):
    """Fused CompleteNetwork forward.

    Returns ((prediction, time_derivs, thetas, output_nn), norms) with the
    same sample-major shapes as the PyTorch module; `norms` is the library's
    side-effect value (cheap glue computed from the kernel outputs).
    """
    n = t.shape[0]
    h = params["w2"].shape[0]
    nf = params["coeffs"].shape[0]
    assert nf == _NF  # [1, u, u^2, u^3] library

    tn = _pick_tile(n, h, nf, _num_tensorcores())
    assert n % tn == 0

    # layout plumbing (reshapes of (N,1)<->(1,N) and (1,H)<->(H,1) are free)
    t_fm = t.astype(jnp.float32).reshape(1, n)
    w1 = params["w1"].astype(jnp.float32).reshape(h, 1)
    b1 = params["b1"].astype(jnp.float32).reshape(h, 1)
    w2 = params["w2"].astype(jnp.float32)
    b2 = params["b2"].astype(jnp.float32).reshape(h, 1)
    w3 = params["w3"].astype(jnp.float32).reshape(h, 1)
    scal = jnp.concatenate(
        [params["b3"].reshape(-1), params["coeffs"].reshape(-1)]
    ).astype(jnp.float32)                                       # (1+NF,)

    args = (scal, t_fm, w1, b1, w2, b2, w3)
    try:
        fm = _build_call(n, tn, h, nf, single_buffer_weights=True)(*args)
        fm = jax.block_until_ready(fm)
    except Exception:
        # fallback if this Pallas build rejects single-buffered BlockSpecs
        fm = _build_call(n, tn, h, nf, single_buffer_weights=False)(*args)

    # unpack the single feature-major output stream
    theta = fm[0:nf, :].T                         # (N, NF)
    pred = fm[1:2, :].reshape(n, 1)               # == theta[:, 1:2]
    dt = fm[nf:nf + 1, :].reshape(n, 1)
    out = fm[nf + 1:nf + 2, :].reshape(n, 1)

    # Library.forward side effect (self.norms):
    norms = (jnp.linalg.norm(dt) /
             jnp.linalg.norm(theta, axis=0, keepdims=True)).squeeze()

    return (pred, dt, theta, out), norms


# ----------------------------------------------------------------------------
# Pure-JAX reference (correctness check only)
# ----------------------------------------------------------------------------
def reference(t, params):
    t = t.astype(jnp.float32)
    w1t = params["w1"].T                                     # (1, H)
    z1 = t @ w1t + params["b1"][None, :]
    h1 = jnp.tanh(z1)
    dh1 = (1.0 - h1 * h1) * w1t
    z2 = h1 @ params["w2"].T + params["b2"][None, :]
    h2 = jnp.tanh(z2)
    dh2 = (1.0 - h2 * h2) * (dh1 @ params["w2"].T)
    u = h2 @ params["w3"].T + params["b3"][None, :]
    du = dh2 @ params["w3"].T
    theta = jnp.concatenate([jnp.ones_like(u), u, u * u, u * u * u], axis=1)
    out = theta @ params["coeffs"]
    norms = (jnp.linalg.norm(du) /
             jnp.linalg.norm(theta, axis=0, keepdims=True)).squeeze()
    return u, du, theta, out, norms


if __name__ == "__main__":
    key = jax.random.PRNGKey(0)
    N, H, NF = 1024, 32, 4   # samples, hidden width, library features

    k_t, k1, k2, k3, k4, k5, k6, k7 = jax.random.split(key, 8)
    t = jax.random.uniform(k_t, (N, 1), jnp.float32, minval=-1.0, maxval=1.0)

    # deterministic synthetic parameters (PyTorch nn.Linear (out, in) layout)
    params = {
        "w1": 0.5 * jax.random.normal(k1, (H, 1), jnp.float32),
        "b1": 0.1 * jax.random.normal(k2, (H,), jnp.float32),
        "w2": (1.0 / jnp.sqrt(H)) * jax.random.normal(k3, (H, H), jnp.float32),
        "b2": 0.1 * jax.random.normal(k4, (H,), jnp.float32),
        "w3": (1.0 / jnp.sqrt(H)) * jax.random.normal(k5, (1, H), jnp.float32),
        "b3": 0.1 * jax.random.normal(k6, (1,), jnp.float32),
        "coeffs": jax.random.normal(k7, (NF, 1), jnp.float32),
    }

    (pred, time_derivs, thetas, output_nn), norms = complete_network(t, params)
    jax.block_until_ready((pred, time_derivs, thetas, output_nn, norms))

    # sanity check against plain-JAX reference (including the norms side effect)
    r_pred, r_dt, r_theta, r_out, r_norms = reference(t, params)
    assert jnp.allclose(pred, r_pred, rtol=1e-4, atol=1e-4)
    assert jnp.allclose(time_derivs, r_dt, rtol=1e-4, atol=1e-4)
    assert jnp.allclose(thetas, r_theta, rtol=1e-4, atol=1e-4)
    assert jnp.allclose(output_nn, r_out, rtol=1e-4, atol=1e-4)
    assert jnp.allclose(norms, r_norms, rtol=1e-4, atol=1e-4)

    # TODO(synk): sparsity_masks / estimator_coeffs / constraint_coeffs read
    # attributes (self.constraint, self.sparse_estimator) never defined in
    # __init__; they are not part of forward and are not implemented here.

    print("KERNEL_OK")
</pallas_src>

<mosaic_0001>
module attributes {stable_mosaic.version = 11 : i64} {
  func.func @complete_network_kernel(%arg0: i32, %arg1: memref<5xf32, #tpu.memory_space<smem>>, %arg2: memref<1x1024xf32, #tpu.memory_space<vmem>>, %arg3: memref<32x1xf32, #tpu.memory_space<vmem>>, %arg4: memref<32x1xf32, #tpu.memory_space<vmem>>, %arg5: memref<32x32xf32, #tpu.memory_space<vmem>>, %arg6: memref<32x1xf32, #tpu.memory_space<vmem>>, %arg7: memref<32x1xf32, #tpu.memory_space<vmem>>, %arg8: memref<6x1024xf32, #tpu.memory_space<vmem>>) attributes {dimension_semantics = [#tpu.dimension_semantics<parallel>], iteration_bounds = array<i64: 1>, scalar_prefetch = 0 : i64, scratch_operands = 0 : i64, tpu.core_type = #tpu.core_type<tc>, window_params = [{transform_indices = @transform_0, window_bounds = array<i64: 5>}, {transform_indices = @transform_1, window_bounds = array<i64: 1, 1024>}, {pipeline_mode = #tpu.pipeline_mode<synchronous>, transform_indices = @transform_2, window_bounds = array<i64: 32, 1>}, {pipeline_mode = #tpu.pipeline_mode<synchronous>, transform_indices = @transform_3, window_bounds = array<i64: 32, 1>}, {pipeline_mode = #tpu.pipeline_mode<synchronous>, transform_indices = @transform_4, window_bounds = array<i64: 32, 32>}, {pipeline_mode = #tpu.pipeline_mode<synchronous>, transform_indices = @transform_5, window_bounds = array<i64: 32, 1>}, {pipeline_mode = #tpu.pipeline_mode<synchronous>, transform_indices = @transform_6, window_bounds = array<i64: 32, 1>}, {transform_indices = @transform_7, window_bounds = array<i64: 6, 1024>}]} {
    %c0 = arith.constant 0 : index
    %c0_0 = arith.constant 0 : index
    %0 = vector.load %arg2[%c0, %c0_0] : memref<1x1024xf32, #tpu.memory_space<vmem>>, vector<1x1024xf32>
    %c0_1 = arith.constant 0 : index
    %c0_2 = arith.constant 0 : index
    %1 = vector.load %arg3[%c0_1, %c0_2] : memref<32x1xf32, #tpu.memory_space<vmem>>, vector<32x1xf32>
    %c0_3 = arith.constant 0 : index
    %c0_4 = arith.constant 0 : index
    %2 = vector.load %arg4[%c0_3, %c0_4] : memref<32x1xf32, #tpu.memory_space<vmem>>, vector<32x1xf32>
    %c0_5 = arith.constant 0 : index
    %c0_6 = arith.constant 0 : index
    %3 = vector.load %arg5[%c0_5, %c0_6] : memref<32x32xf32, #tpu.memory_space<vmem>>, vector<32x32xf32>
    %c0_7 = arith.constant 0 : index
    %c0_8 = arith.constant 0 : index
    %4 = vector.load %arg6[%c0_7, %c0_8] : memref<32x1xf32, #tpu.memory_space<vmem>>, vector<32x1xf32>
    %c0_9 = arith.constant 0 : index
    %c0_10 = arith.constant 0 : index
    %5 = vector.load %arg7[%c0_9, %c0_10] : memref<32x1xf32, #tpu.memory_space<vmem>>, vector<32x1xf32>
    %c0_11 = arith.constant 0 : index
    %6 = memref.load %arg1[%c0_11] : memref<5xf32, #tpu.memory_space<smem>>
    %c1 = arith.constant 1 : index
    %7 = memref.load %arg1[%c1] : memref<5xf32, #tpu.memory_space<smem>>
    %c2 = arith.constant 2 : index
    %8 = memref.load %arg1[%c2] : memref<5xf32, #tpu.memory_space<smem>>
    %c3 = arith.constant 3 : index
    %9 = memref.load %arg1[%c3] : memref<5xf32, #tpu.memory_space<smem>>
    %c4 = arith.constant 4 : index
    %10 = memref.load %arg1[%c4] : memref<5xf32, #tpu.memory_space<smem>>
    %11 = vector.shape_cast %1 : vector<32x1xf32> to vector<32x1xf32>
    %12 = vector.broadcast %11 : vector<32x1xf32> to vector<32x1024xf32>
    %13 = vector.broadcast %0 : vector<1x1024xf32> to vector<32x1024xf32>
    %14 = arith.mulf %12, %13 : vector<32x1024xf32>
    %15 = vector.broadcast %2 : vector<32x1xf32> to vector<32x1024xf32>
    %16 = arith.addf %14, %15 : vector<32x1024xf32>
    %17 = math.tanh %16 : vector<32x1024xf32>
    %18 = arith.mulf %17, %17 : vector<32x1024xf32>
    %cst = arith.constant 1.000000e+00 : f32
    %19 = vector.broadcast %cst : f32 to vector<32x1024xf32>
    %20 = arith.subf %19, %18 : vector<32x1024xf32>
    %21 = arith.mulf %20, %12 : vector<32x1024xf32>
    %cst_12 = arith.constant dense<0.000000e+00> : vector<32x1024xf32>
    %22 = tpu.matmul %3, %17, %cst_12 {dimension_numbers = #tpu.dot_dimension_numbers<[1], [0], [0], [1], [0, 0, 1, 1], [], []>} : vector<32x32xf32>, vector<32x1024xf32>, vector<32x1024xf32> -> vector<32x1024xf32>
    %cst_13 = arith.constant dense<0.000000e+00> : vector<32x1024xf32>
    %23 = tpu.matmul %3, %21, %cst_13 {dimension_numbers = #tpu.dot_dimension_numbers<[1], [0], [0], [1], [0, 0, 1, 1], [], []>} : vector<32x32xf32>, vector<32x1024xf32>, vector<32x1024xf32> -> vector<32x1024xf32>
    %24 = vector.broadcast %4 : vector<32x1xf32> to vector<32x1024xf32>
    %25 = arith.addf %22, %24 : vector<32x1024xf32>
    %26 = math.tanh %25 : vector<32x1024xf32>
    %27 = arith.mulf %26, %26 : vector<32x1024xf32>
    %cst_14 = arith.constant 1.000000e+00 : f32
    %28 = vector.broadcast %cst_14 : f32 to vector<32x1024xf32>
    %29 = arith.subf %28, %27 : vector<32x1024xf32>
    %30 = arith.mulf %29, %23 : vector<32x1024xf32>
    %31 = vector.broadcast %5 : vector<32x1xf32> to vector<32x1024xf32>
    %32 = arith.mulf %26, %31 : vector<32x1024xf32>
    %cst_15 = arith.constant dense<0.000000e+00> : vector<1024xf32>
    %33 = vector.multi_reduction <add>, %32, %cst_15 [0] : vector<32x1024xf32> to vector<1024xf32>
    %34 = vector.shape_cast %33 : vector<1024xf32> to vector<1x1024xf32>
    %35 = vector.broadcast %6 : f32 to vector<1x1024xf32>
    %36 = arith.addf %34, %35 : vector<1x1024xf32>
    %37 = vector.broadcast %5 : vector<32x1xf32> to vector<32x1024xf32>
    %38 = arith.mulf %30, %37 : vector<32x1024xf32>
    %cst_16 = arith.constant dense<0.000000e+00> : vector<1024xf32>
    %39 = vector.multi_reduction <add>, %38, %cst_16 [0] : vector<32x1024xf32> to vector<1024xf32>
    %40 = vector.shape_cast %39 : vector<1024xf32> to vector<1x1024xf32>
    %41 = arith.mulf %36, %36 : vector<1x1024xf32>
    %42 = arith.mulf %41, %36 : vector<1x1024xf32>
    %43 = vector.broadcast %8 : f32 to vector<1x1024xf32>
    %44 = arith.mulf %43, %36 : vector<1x1024xf32>
    %45 = vector.broadcast %7 : f32 to vector<1x1024xf32>
    %46 = arith.addf %45, %44 : vector<1x1024xf32>
    %47 = vector.broadcast %9 : f32 to vector<1x1024xf32>
    %48 = arith.mulf %47, %41 : vector<1x1024xf32>
    %49 = arith.addf %46, %48 : vector<1x1024xf32>
    %50 = vector.broadcast %10 : f32 to vector<1x1024xf32>
    %51 = arith.mulf %50, %42 : vector<1x1024xf32>
    %52 = arith.addf %49, %51 : vector<1x1024xf32>
    %cst_17 = arith.constant 1.000000e+00 : f32
    %53 = vector.broadcast %cst_17 : f32 to vector<1x1024xf32>
    %54 = tpu.concatenate %53, %36, %41, %42, %40, %52 in 0 : vector<1x1024xf32>, vector<1x1024xf32>, vector<1x1024xf32>, vector<1x1024xf32>, vector<1x1024xf32>, vector<1x1024xf32> -> vector<6x1024xf32>
    %c0_18 = arith.constant 0 : index
    %c0_19 = arith.constant 0 : index
    %55 = vector.load %arg8[%c0_18, %c0_19] : memref<6x1024xf32, #tpu.memory_space<vmem>>, vector<6x1024xf32>
    tpu.vector_store %arg8[%c0_18, %c0_19], %54 {strides = array<i32>} : memref<6x1024xf32, #tpu.memory_space<vmem>>, vector<6x1024xf32>,
    return
  }
  func.func @transform_0(%arg0: i32) -> i32 {
    %c0_i32 = arith.constant 0 : i32
    %c0_i32_0 = arith.constant 0 : i32
    return %c0_i32 : i32
  }
  func.func @transform_1(%arg0: i32) -> (i32, i32) {
    %c0_i32 = arith.constant 0 : i32
    %c0_i32_0 = arith.constant 0 : i32
    return %c0_i32, %arg0 : i32, i32
  }
  func.func @transform_2(%arg0: i32) -> (i32, i32) {
    %c0_i32 = arith.constant 0 : i32
    %c0_i32_0 = arith.constant 0 : i32
    %c0_i32_1 = arith.constant 0 : i32
    return %c0_i32, %c0_i32_0 : i32, i32
  }
  func.func @transform_3(%arg0: i32) -> (i32, i32) {
    %c0_i32 = arith.constant 0 : i32
    %c0_i32_0 = arith.constant 0 : i32
    %c0_i32_1 = arith.constant 0 : i32
    return %c0_i32, %c0_i32_0 : i32, i32
  }
  func.func @transform_4(%arg0: i32) -> (i32, i32) {
    %c0_i32 = arith.constant 0 : i32
    %c0_i32_0 = arith.constant 0 : i32
    %c0_i32_1 = arith.constant 0 : i32
    return %c0_i32, %c0_i32_0 : i32, i32
  }
  func.func @transform_5(%arg0: i32) -> (i32, i32) {
    %c0_i32 = arith.constant 0 : i32
    %c0_i32_0 = arith.constant 0 : i32
    %c0_i32_1 = arith.constant 0 : i32
    return %c0_i32, %c0_i32_0 : i32, i32
  }
  func.func @transform_6(%arg0: i32) -> (i32, i32) {
    %c0_i32 = arith.constant 0 : i32
    %c0_i32_0 = arith.constant 0 : i32
    %c0_i32_1 = arith.constant 0 : i32
    return %c0_i32, %c0_i32_0 : i32, i32
  }
  func.func @transform_7(%arg0: i32) -> (i32, i32) {
    %c0_i32 = arith.constant 0 : i32
    %c0_i32_0 = arith.constant 0 : i32
    return %c0_i32, %arg0 : i32, i32
  }
}

module attributes {stable_mosaic.version = 11 : i64} {
  func.func @complete_network_kernel(%arg0: i32, %arg1: memref<5xf32, #tpu.memory_space<smem>>, %arg2: memref<1x1024xf32, #tpu.memory_space<vmem>>, %arg3: memref<32x1xf32, #tpu.memory_space<vmem>>, %arg4: memref<32x1xf32, #tpu.memory_space<vmem>>, %arg5: memref<32x32xf32, #tpu.memory_space<vmem>>, %arg6: memref<32x1xf32, #tpu.memory_space<vmem>>, %arg7: memref<32x1xf32, #tpu.memory_space<vmem>>, %arg8: memref<6x1024xf32, #tpu.memory_space<vmem>>) attributes {dimension_semantics = [#tpu.dimension_semantics<parallel>], iteration_bounds = array<i64: 1>, scalar_prefetch = 0 : i64, scratch_operands = 0 : i64, tpu.core_type = #tpu.core_type<tc>, window_params = [{transform_indices = @transform_0, window_bounds = array<i64: 5>}, {transform_indices = @transform_1, window_bounds = array<i64: 1, 1024>}, {pipeline_mode = #tpu.pipeline_mode<synchronous>, transform_indices = @transform_2, window_bounds = array<i64: 32, 1>}, {pipeline_mode = #tpu.pipeline_mode<synchronous>, transform_indices = @transform_3, window_bounds = array<i64: 32, 1>}, {pipeline_mode = #tpu.pipeline_mode<synchronous>, transform_indices = @transform_4, window_bounds = array<i64: 32, 32>}, {pipeline_mode = #tpu.pipeline_mode<synchronous>, transform_indices = @transform_5, window_bounds = array<i64: 32, 1>}, {pipeline_mode = #tpu.pipeline_mode<synchronous>, transform_indices = @transform_6, window_bounds = array<i64: 32, 1>}, {transform_indices = @transform_7, window_bounds = array<i64: 6, 1024>}]} {
    %c0 = arith.constant 0 : index
    %c0_0 = arith.constant 0 : index
    %0 = vector.load %arg2[%c0, %c0_0] : memref<1x1024xf32, #tpu.memory_space<vmem>>, vector<1x1024xf32>
    %c0_1 = arith.constant 0 : index
    %c0_2 = arith.constant 0 : index
    %1 = vector.load %arg3[%c0_1, %c0_2] : memref<32x1xf32, #tpu.memory_space<vmem>>, vector<32x1xf32>
    %c0_3 = arith.constant 0 : index
    %c0_4 = arith.constant 0 : index
    %2 = vector.load %arg4[%c0_3, %c0_4] : memref<32x1xf32, #tpu.memory_space<vmem>>, vector<32x1xf32>
    %c0_5 = arith.constant 0 : index
    %c0_6 = arith.constant 0 : index
    %3 = vector.load %arg5[%c0_5, %c0_6] : memref<32x32xf32, #tpu.memory_space<vmem>>, vector<32x32xf32>
    %c0_7 = arith.constant 0 : index
    %c0_8 = arith.constant 0 : index
    %4 = vector.load %arg6[%c0_7, %c0_8] : memref<32x1xf32, #tpu.memory_space<vmem>>, vector<32x1xf32>
    %c0_9 = arith.constant 0 : index
    %c0_10 = arith.constant 0 : index
    %5 = vector.load %arg7[%c0_9, %c0_10] : memref<32x1xf32, #tpu.memory_space<vmem>>, vector<32x1xf32>
    %c0_11 = arith.constant 0 : index
    %6 = memref.load %arg1[%c0_11] : memref<5xf32, #tpu.memory_space<smem>>
    %c1 = arith.constant 1 : index
    %7 = memref.load %arg1[%c1] : memref<5xf32, #tpu.memory_space<smem>>
    %c2 = arith.constant 2 : index
    %8 = memref.load %arg1[%c2] : memref<5xf32, #tpu.memory_space<smem>>
    %c3 = arith.constant 3 : index
    %9 = memref.load %arg1[%c3] : memref<5xf32, #tpu.memory_space<smem>>
    %c4 = arith.constant 4 : index
    %10 = memref.load %arg1[%c4] : memref<5xf32, #tpu.memory_space<smem>>
    %11 = vector.shape_cast %1 : vector<32x1xf32> to vector<32x1xf32>
    %12 = vector.broadcast %11 : vector<32x1xf32> to vector<32x1024xf32>
    %13 = vector.broadcast %0 : vector<1x1024xf32> to vector<32x1024xf32>
    %14 = arith.mulf %12, %13 : vector<32x1024xf32>
    %15 = vector.broadcast %2 : vector<32x1xf32> to vector<32x1024xf32>
    %16 = arith.addf %14, %15 : vector<32x1024xf32>
    %17 = math.tanh %16 : vector<32x1024xf32>
    %18 = arith.mulf %17, %17 : vector<32x1024xf32>
    %cst = arith.constant 1.000000e+00 : f32
    %19 = vector.broadcast %cst : f32 to vector<32x1024xf32>
    %20 = arith.subf %19, %18 : vector<32x1024xf32>
    %21 = arith.mulf %20, %12 : vector<32x1024xf32>
    %cst_12 = arith.constant dense<0.000000e+00> : vector<32x1024xf32>
    %22 = tpu.matmul %3, %17, %cst_12 {dimension_numbers = #tpu.dot_dimension_numbers<[1], [0], [0], [1], [0, 0, 1, 1], [], []>} : vector<32x32xf32>, vector<32x1024xf32>, vector<32x1024xf32> -> vector<32x1024xf32>
    %cst_13 = arith.constant dense<0.000000e+00> : vector<32x1024xf32>
    %23 = tpu.matmul %3, %21, %cst_13 {dimension_numbers = #tpu.dot_dimension_numbers<[1], [0], [0], [1], [0, 0, 1, 1], [], []>} : vector<32x32xf32>, vector<32x1024xf32>, vector<32x1024xf32> -> vector<32x1024xf32>
    %24 = vector.broadcast %4 : vector<32x1xf32> to vector<32x1024xf32>
    %25 = arith.addf %22, %24 : vector<32x1024xf32>
    %26 = math.tanh %25 : vector<32x1024xf32>
    %27 = arith.mulf %26, %26 : vector<32x1024xf32>
    %cst_14 = arith.constant 1.000000e+00 : f32
    %28 = vector.broadcast %cst_14 : f32 to vector<32x1024xf32>
    %29 = arith.subf %28, %27 : vector<32x1024xf32>
    %30 = arith.mulf %29, %23 : vector<32x1024xf32>
    %31 = vector.broadcast %5 : vector<32x1xf32> to vector<32x1024xf32>
    %32 = arith.mulf %26, %31 : vector<32x1024xf32>
    %cst_15 = arith.constant dense<0.000000e+00> : vector<1024xf32>
    %33 = vector.multi_reduction <add>, %32, %cst_15 [0] : vector<32x1024xf32> to vector<1024xf32>
    %34 = vector.shape_cast %33 : vector<1024xf32> to vector<1x1024xf32>
    %35 = vector.broadcast %6 : f32 to vector<1x1024xf32>
    %36 = arith.addf %34, %35 : vector<1x1024xf32>
    %37 = vector.broadcast %5 : vector<32x1xf32> to vector<32x1024xf32>
    %38 = arith.mulf %30, %37 : vector<32x1024xf32>
    %cst_16 = arith.constant dense<0.000000e+00> : vector<1024xf32>
    %39 = vector.multi_reduction <add>, %38, %cst_16 [0] : vector<32x1024xf32> to vector<1024xf32>
    %40 = vector.shape_cast %39 : vector<1024xf32> to vector<1x1024xf32>
    %41 = arith.mulf %36, %36 : vector<1x1024xf32>
    %42 = arith.mulf %41, %36 : vector<1x1024xf32>
    %43 = vector.broadcast %8 : f32 to vector<1x1024xf32>
    %44 = arith.mulf %43, %36 : vector<1x1024xf32>
    %45 = vector.broadcast %7 : f32 to vector<1x1024xf32>
    %46 = arith.addf %45, %44 : vector<1x1024xf32>
    %47 = vector.broadcast %9 : f32 to vector<1x1024xf32>
    %48 = arith.mulf %47, %41 : vector<1x1024xf32>
    %49 = arith.addf %46, %48 : vector<1x1024xf32>
    %50 = vector.broadcast %10 : f32 to vector<1x1024xf32>
    %51 = arith.mulf %50, %42 : vector<1x1024xf32>
    %52 = arith.addf %49, %51 : vector<1x1024xf32>
    %cst_17 = arith.constant 1.000000e+00 : f32
    %53 = vector.broadcast %cst_17 : f32 to vector<1x1024xf32>
    %54 = tpu.concatenate %53, %36, %41, %42, %40, %52 in 0 : vector<1x1024xf32>, vector<1x1024xf32>, vector<1x1024xf32>, vector<1x1024xf32>, vector<1x1024xf32>, vector<1x1024xf32> -> vector<6x1024xf32>
    %c0_18 = arith.constant 0 : index
    %c0_19 = arith.constant 0 : index
    %55 = vector.load %arg8[%c0_18, %c0_19] : memref<6x1024xf32, #tpu.memory_space<vmem>>, vector<6x1024xf32>
    tpu.vector_store %arg8[%c0_18, %c0_19], %54 {strides = array<i32>} : memref<6x1024xf32, #tpu.memory_space<vmem>>, vector<6x1024xf32>,
    return
  }
  func.func @transform_0(%arg0: i32) -> i32 {
    %c0_i32 = arith.constant 0 : i32
    %c0_i32_0 = arith.constant 0 : i32
    return %c0_i32 : i32
  }
  func.func @transform_1(%arg0: i32) -> (i32, i32) {
    %c0_i32 = arith.constant 0 : i32
    %c0_i32_0 = arith.constant 0 : i32
    return %c0_i32, %arg0 : i32, i32
  }
  func.func @transform_2(%arg0: i32) -> (i32, i32) {
    %c0_i32 = arith.constant 0 : i32
    %c0_i32_0 = arith.constant 0 : i32
    %c0_i32_1 = arith.constant 0 : i32
    return %c0_i32, %c0_i32_0 : i32, i32
  }
  func.func @transform_3(%arg0: i32) -> (i32, i32) {
    %c0_i32 = arith.constant 0 : i32
    %c0_i32_0 = arith.constant 0 : i32
    %c0_i32_1 = arith.constant 0 : i32
    return %c0_i32, %c0_i32_0 : i32, i32
  }
  func.func @transform_4(%arg0: i32) -> (i32, i32) {
    %c0_i32 = arith.constant 0 : i32
    %c0_i32_0 = arith.constant 0 : i32
    %c0_i32_1 = arith.constant 0 : i32
    return %c0_i32, %c0_i32_0 : i32, i32
  }
  func.func @transform_5(%arg0: i32) -> (i32, i32) {
    %c0_i32 = arith.constant 0 : i32
    %c0_i32_0 = arith.constant 0 : i32
    %c0_i32_1 = arith.constant 0 : i32
    return %c0_i32, %c0_i32_0 : i32, i32
  }
  func.func @transform_6(%arg0: i32) -> (i32, i32) {
    %c0_i32 = arith.constant 0 : i32
    %c0_i32_0 = arith.constant 0 : i32
    %c0_i32_1 = arith.constant 0 : i32
    return %c0_i32, %c0_i32_0 : i32, i32
  }
  func.func @transform_7(%arg0: i32) -> (i32, i32) {
    %c0_i32 = arith.constant 0 : i32
    %c0_i32_0 = arith.constant 0 : i32
    return %c0_i32, %arg0 : i32, i32
  }
}

</mosaic_0001>

<llo_original>
// kernel: tpu_custom_call.1
$region0: #{tpu_custom_call.1}
  #allocation0 [shape = 'u32[]', space=smem, size = 0x4, offset = 0x4, fixed_abs, tag = 'smem constant byte address 0x4 - core index']
  #allocation1 [shape = 'u32[72,128]{1,0:T(1,128)}', space=vmem, size = 0x9000, scoped, tag = 'internal scratch']
  %s0 = inlined_call_operand.vmem [shape: f32[5], index: 0, kind: input, shape index: {}]
  %s1 = inlined_call_operand.vmem [shape: f32[1,1024], index: 1, kind: input, shape index: {}]
  %s2 = inlined_call_operand.vmem [shape: f32[32,1], index: 2, kind: input, shape index: {}]
  %s3 = inlined_call_operand.vmem [shape: f32[32,1], index: 3, kind: input, shape index: {}]
  %s4 = inlined_call_operand.vmem [shape: f32[32,32], index: 4, kind: input, shape index: {}]
  %s5 = inlined_call_operand.vmem [shape: f32[32,1], index: 5, kind: input, shape index: {}]
  %s6 = inlined_call_operand.vmem [shape: f32[32,1], index: 6, kind: input, shape index: {}]
  %s7 = inlined_call_operand.hbm [shape: f32[6,1024], index: 7, kind: output, shape index: {}]
  %s8 = sld [smem:[#allocation0]]
  $region42: #{tpu_custom_call.1} parent=0
    _
  %s10 = ssub.s32 1, %s8
  %s11 = scalar_select 0, %s10, %s8
  $region1: #{tpu_custom_call.1} parent=0
    #allocation2 [shape = 'u8[512]{0}', space=smem, size = 0x200, scoped, tag = 'input window, operand 0, single buffered']
    #allocation3 [shape = 's32[1]{0}', space=sflag, size = 0x4, scoped, tag = 'scoped memory for tpu_custom_call.1']
    #allocation4 [shape = 's32[1]{0}', space=sflag, size = 0x4, scoped, tag = 'scoped memory for tpu_custom_call.1']
    #allocation5 [shape = 'u8[32768]{0}', space=vmem, size = 0x8000, scoped, tag = 'output window, operand 0, single buffered']
    %12 = vsyncpa [#allocation4], 0
    %13 = vsyncpa [#allocation3], 0
    // Predicated region
    $region2: #{tpu_custom_call.1} parent=1 // pred_check
      _
    $region3: #{tpu_custom_call.1} parent=1 // pred_check_branch
      %15 = sbr.rel (0) target = $region5
    $region4: #{tpu_custom_call.1} parent=1 // pred_region
      %17 = vsyncadd [#allocation4], 0
      %s19 = sshll.u32 %s0, 4
      %s20 = int_to_ptr.vmem [resolvable:$true] %s19
      %22 = dma.vmem_to_smem %s20, 16, [#allocation2], [#allocation4]
    $region5: #{tpu_custom_call.1} parent=1 // pred_fallthru
      _
    // Predicated region
    $region6: #{tpu_custom_call.1} parent=1 // pred_check
      _
    $region7: #{tpu_custom_call.1} parent=1 // pred_check_branch
      %24 = sbr.rel (0) target = $region9
    $region8: #{tpu_custom_call.1} parent=1 // pred_region
      _
    $region9: #{tpu_custom_call.1} parent=1 // pred_fallthru
      _
    // Predicated region
    $region10: #{tpu_custom_call.1} parent=1 // pred_check
      _
    $region11: #{tpu_custom_call.1} parent=1 // pred_check_branch
      %26 = sbr.rel (0) target = $region13
    $region12: #{tpu_custom_call.1} parent=1 // pred_region
      _
    $region13: #{tpu_custom_call.1} parent=1 // pred_fallthru
      _
    // Predicated region
    $region14: #{tpu_custom_call.1} parent=1 // pred_check
      _
    $region15: #{tpu_custom_call.1} parent=1 // pred_check_branch
      %28 = sbr.rel (0) target = $region17
    $region16: #{tpu_custom_call.1} parent=1 // pred_region
      _
    $region17: #{tpu_custom_call.1} parent=1 // pred_fallthru
      _
    // Predicated region
    $region18: #{tpu_custom_call.1} parent=1 // pred_check
      _
    $region19: #{tpu_custom_call.1} parent=1 // pred_check_branch
      %30 = sbr.rel (0) target = $region21
    $region20: #{tpu_custom_call.1} parent=1 // pred_region
      _
    $region21: #{tpu_custom_call.1} parent=1 // pred_fallthru
      _
    // Predicated region
    $region22: #{tpu_custom_call.1} parent=1 // pred_check
      _
    $region23: #{tpu_custom_call.1} parent=1 // pred_check_branch
      %32 = sbr.rel (0) target = $region25
    $region24: #{tpu_custom_call.1} parent=1 // pred_region
      _
    $region25: #{tpu_custom_call.1} parent=1 // pred_fallthru
      _
    // Predicated region
    $region26: #{tpu_custom_call.1} parent=1 // pred_check
      _
    $region27: #{tpu_custom_call.1} parent=1 // pred_check_branch
      %34 = sbr.rel (0) target = $region29
    $region28: #{tpu_custom_call.1} parent=1 // pred_region
      _
    $region29: #{tpu_custom_call.1} parent=1 // pred_fallthru
      _
    // Predicated region
    $region30: #{tpu_custom_call.1} parent=1 // pred_check
      _
    $region31: #{tpu_custom_call.1} parent=1 // pred_check_branch
      %36 = sbr.rel (0) target = $region33
    $region32: #{tpu_custom_call.1} parent=1 // pred_region
      %38 = dma.done [#allocation4], 16
    $region33: #{tpu_custom_call.1} parent=1 // pred_fallthru
      _
    %39 = sfence
    %v40 = vld [vmem:[%s1] sm:$0xff]
    %v41 = vld [vmem:[%s2] sm:$0xff]
    %v42 = vld [vmem:[%s2 + $0x8] sm:$0xff]
    %v43 = vld [vmem:[%s2 + $0x10] sm:$0xff]
    %v44 = vld [vmem:[%s2 + $0x18] sm:$0xff]
    %v45 = vld [vmem:[%s3] sm:$0xff]
    %v46 = vld [vmem:[%s3 + $0x8] sm:$0xff]
    %v47 = vld [vmem:[%s3 + $0x10] sm:$0xff]
    %v48 = vld [vmem:[%s3 + $0x18] sm:$0xff]
    %v49 = vld [vmem:[%s4] sm:$0xff]
    %v50 = vld [vmem:[%s4 + $0x8] sm:$0xff]
    %v51 = vld [vmem:[%s4 + $0x10] sm:$0xff]
    %v52 = vld [vmem:[%s4 + $0x18] sm:$0xff]
    %v53 = vld [vmem:[%s5] sm:$0xff]
    %v54 = vld [vmem:[%s5 + $0x8] sm:$0xff]
    %v55 = vld [vmem:[%s5 + $0x10] sm:$0xff]
    %v56 = vld [vmem:[%s5 + $0x18] sm:$0xff]
    %v57 = vld [vmem:[%s6] sm:$0xff]
    %v58 = vld [vmem:[%s6 + $0x8] sm:$0xff]
    %v59 = vld [vmem:[%s6 + $0x10] sm:$0xff]
    %v60 = vld [vmem:[%s6 + $0x18] sm:$0xff]
    %s61 = sld [smem:[#allocation2]]
    %s62 = sld [smem:[#allocation2 + $0x1]]
    %s63 = sld [smem:[#allocation2 + $0x2]]
    %s64 = sld [smem:[#allocation2 + $0x3]]
    %s65 = sld [smem:[#allocation2 + $0x4]]
    %67 = vset.pattern.permute.xlu0 0
    %68 = vperm.xlu0 %67, %v41
    %v69 = vpop.permute.xlu0 %68
    %72 = vset.pattern.permute.xlu0 0
    %73 = vperm.xlu0 %72, %v42
    %v74 = vpop.permute.xlu0 %73
    %77 = vset.pattern.permute.xlu0 0
    %78 = vperm.xlu0 %77, %v43
    %v79 = vpop.permute.xlu0 %78
    %82 = vset.pattern.permute.xlu0 0
    %83 = vperm.xlu0 %82, %v44
    %v84 = vpop.permute.xlu0 %83
    %v87 = vperm.slane %v40, 0
    %v88 = vperm.slane %v40, 1
    %v89 = vperm.slane %v40, 2
    %v90 = vperm.slane %v40, 3
    %v91 = vperm.slane %v40, 4
    %v92 = vperm.slane %v40, 5
    %v93 = vperm.slane %v40, 6
    %v94 = vperm.slane %v40, 7
    %v103 = vmul.f32 %v69, %v87
    %v104 = vmul.f32 %v69, %v88
    %v105 = vmul.f32 %v69, %v89
    %v106 = vmul.f32 %v69, %v90
    %v107 = vmul.f32 %v69, %v91
    %v108 = vmul.f32 %v69, %v92
    %v109 = vmul.f32 %v69, %v93
    %v110 = vmul.f32 %v69, %v94
    %v111 = vmul.f32 %v74, %v87
    %v112 = vmul.f32 %v74, %v88
    %v113 = vmul.f32 %v74, %v89
    %v114 = vmul.f32 %v74, %v90
    %v115 = vmul.f32 %v74, %v91
    %v116 = vmul.f32 %v74, %v92
    %v117 = vmul.f32 %v74, %v93
    %v118 = vmul.f32 %v74, %v94
    %v119 = vmul.f32 %v79, %v87
    %v120 = vmul.f32 %v79, %v88
    %v121 = vmul.f32 %v79, %v89
    %v122 = vmul.f32 %v79, %v90
    %v123 = vmul.f32 %v79, %v91
    %v124 = vmul.f32 %v79, %v92
    %v125 = vmul.f32 %v79, %v93
    %v126 = vmul.f32 %v79, %v94
    %v127 = vmul.f32 %v84, %v87
    %v128 = vmul.f32 %v84, %v88
    %v129 = vmul.f32 %v84, %v89
    %v130 = vmul.f32 %v84, %v90
    %v131 = vmul.f32 %v84, %v91
    %v132 = vmul.f32 %v84, %v92
    %v133 = vmul.f32 %v84, %v93
    %v134 = vmul.f32 %v84, %v94
    %136 = vset.pattern.permute.xlu0 0
    %137 = vperm.xlu0 %136, %v45
    %v138 = vpop.permute.xlu0 %137
    %141 = vset.pattern.permute.xlu0 0
    %142 = vperm.xlu0 %141, %v46
    %v143 = vpop.permute.xlu0 %142
    %146 = vset.pattern.permute.xlu0 0
    %147 = vperm.xlu0 %146, %v47
    %v148 = vpop.permute.xlu0 %147
    %151 = vset.pattern.permute.xlu0 0
    %152 = vperm.xlu0 %151, %v48
    %v153 = vpop.permute.xlu0 %152
    %v155 = vadd.f32 %v103, %v138
    %v156 = vadd.f32 %v104, %v138
    %v157 = vadd.f32 %v105, %v138
    %v158 = vadd.f32 %v106, %v138
    %v159 = vadd.f32 %v107, %v138
    %v160 = vadd.f32 %v108, %v138
    %v161 = vadd.f32 %v109, %v138
    %v162 = vadd.f32 %v110, %v138
    %v163 = vadd.f32 %v111, %v143
    %v164 = vadd.f32 %v112, %v143
    %v165 = vadd.f32 %v113, %v143
    %v166 = vadd.f32 %v114, %v143
    %v167 = vadd.f32 %v115, %v143
    %v168 = vadd.f32 %v116, %v143
    %v169 = vadd.f32 %v117, %v143
    %v170 = vadd.f32 %v118, %v143
    %v171 = vadd.f32 %v119, %v148
    %v172 = vadd.f32 %v120, %v148
    %v173 = vadd.f32 %v121, %v148
    %v174 = vadd.f32 %v122, %v148
    %v175 = vadd.f32 %v123, %v148
    %v176 = vadd.f32 %v124, %v148
    %v177 = vadd.f32 %v125, %v148
    %v178 = vadd.f32 %v126, %v148
    %v179 = vadd.f32 %v127, %v153
    %v180 = vadd.f32 %v128, %v153
    %v181 = vadd.f32 %v129, %v153
    %v182 = vadd.f32 %v130, %v153
    %v183 = vadd.f32 %v131, %v153
    %v184 = vadd.f32 %v132, %v153
    %v185 = vadd.f32 %v133, %v153
    %v186 = vadd.f32 %v134, %v153
    %v187 = vtanh.pop %v155
    %v188 = vtanh.pop %v156
    %v189 = vtanh.pop %v157
    %v190 = vtanh.pop %v158
    %v191 = vtanh.pop %v159
    %v192 = vtanh.pop %v160
    %v193 = vtanh.pop %v161
    %v194 = vtanh.pop %v162
    %v195 = vtanh.pop %v163
    %v196 = vtanh.pop %v164
    %v197 = vtanh.pop %v165
    %v198 = vtanh.pop %v166
    %v199 = vtanh.pop %v167
    %v200 = vtanh.pop %v168
    %v201 = vtanh.pop %v169
    %v202 = vtanh.pop %v170
    %v203 = vtanh.pop %v171
    %v204 = vtanh.pop %v172
    %v205 = vtanh.pop %v173
    %v206 = vtanh.pop %v174
    %v207 = vtanh.pop %v175
    %v208 = vtanh.pop %v176
    %v209 = vtanh.pop %v177
    %v210 = vtanh.pop %v178
    %v211 = vtanh.pop %v179
    %v212 = vtanh.pop %v180
    %v213 = vtanh.pop %v181
    %v214 = vtanh.pop %v182
    %v215 = vtanh.pop %v183
    %v216 = vtanh.pop %v184
    %v217 = vtanh.pop %v185
    %v218 = vtanh.pop %v186
    %v219 = vmul.f32 %v187, %v187
    %v220 = vmul.f32 %v188, %v188
    %v221 = vmul.f32 %v189, %v189
    %v222 = vmul.f32 %v190, %v190
    %v223 = vmul.f32 %v191, %v191
    %v224 = vmul.f32 %v192, %v192
    %v225 = vmul.f32 %v193, %v193
    %v226 = vmul.f32 %v194, %v194
    %v227 = vmul.f32 %v195, %v195
    %v228 = vmul.f32 %v196, %v196
    %v229 = vmul.f32 %v197, %v197
    %v230 = vmul.f32 %v198, %v198
    %v231 = vmul.f32 %v199, %v199
    %v232 = vmul.f32 %v200, %v200
    %v233 = vmul.f32 %v201, %v201
    %v234 = vmul.f32 %v202, %v202
    %v235 = vmul.f32 %v203, %v203
    %v236 = vmul.f32 %v204, %v204
    %v237 = vmul.f32 %v205, %v205
    %v238 = vmul.f32 %v206, %v206
    %v239 = vmul.f32 %v207, %v207
    %v240 = vmul.f32 %v208, %v208
    %v241 = vmul.f32 %v209, %v209
    %v242 = vmul.f32 %v210, %v210
    %v243 = vmul.f32 %v211, %v211
    %v244 = vmul.f32 %v212, %v212
    %v245 = vmul.f32 %v213, %v213
    %v246 = vmul.f32 %v214, %v214
    %v247 = vmul.f32 %v215, %v215
    %v248 = vmul.f32 %v216, %v216
    %v249 = vmul.f32 %v217, %v217
    %v250 = vmul.f32 %v218, %v218
    %v251 = vsub.f32 1.0, %v219
    %v252 = vsub.f32 1.0, %v220
    %v253 = vsub.f32 1.0, %v221
    %v254 = vsub.f32 1.0, %v222
    %v255 = vsub.f32 1.0, %v223
    %v256 = vsub.f32 1.0, %v224
    %v257 = vsub.f32 1.0, %v225
    %v258 = vsub.f32 1.0, %v226
    %v259 = vsub.f32 1.0, %v227
    %v260 = vsub.f32 1.0, %v228
    %v261 = vsub.f32 1.0, %v229
    %v262 = vsub.f32 1.0, %v230
    %v263 = vsub.f32 1.0, %v231
    %v264 = vsub.f32 1.0, %v232
    %v265 = vsub.f32 1.0, %v233
    %v266 = vsub.f32 1.0, %v234
    %v267 = vsub.f32 1.0, %v235
    %v268 = vsub.f32 1.0, %v236
    %v269 = vsub.f32 1.0, %v237
    %v270 = vsub.f32 1.0, %v238
    %v271 = vsub.f32 1.0, %v239
    %v272 = vsub.f32 1.0, %v240
    %v273 = vsub.f32 1.0, %v241
    %v274 = vsub.f32 1.0, %v242
    %v275 = vsub.f32 1.0, %v243
    %v276 = vsub.f32 1.0, %v244
    %v277 = vsub.f32 1.0, %v245
    %v278 = vsub.f32 1.0, %v246
    %v279 = vsub.f32 1.0, %v247
    %v280 = vsub.f32 1.0, %v248
    %v281 = vsub.f32 1.0, %v249
    %v282 = vsub.f32 1.0, %v250
    %v283 = vmul.f32 %v251, %v69
    %v284 = vmul.f32 %v252, %v69
    %v285 = vmul.f32 %v253, %v69
    %v286 = vmul.f32 %v254, %v69
    %v287 = vmul.f32 %v255, %v69
    %v288 = vmul.f32 %v256, %v69
    %v289 = vmul.f32 %v257, %v69
    %v290 = vmul.f32 %v258, %v69
    %v291 = vmul.f32 %v259, %v74
    %v292 = vmul.f32 %v260, %v74
    %v293 = vmul.f32 %v261, %v74
    %v294 = vmul.f32 %v262, %v74
    %v295 = vmul.f32 %v263, %v74
    %v296 = vmul.f32 %v264, %v74
    %v297 = vmul.f32 %v265, %v74
    %v298 = vmul.f32 %v266, %v74
    %v299 = vmul.f32 %v267, %v79
    %v300 = vmul.f32 %v268, %v79
    %v301 = vmul.f32 %v269, %v79
    %v302 = vmul.f32 %v270, %v79
    %v303 = vmul.f32 %v271, %v79
    %v304 = vmul.f32 %v272, %v79
    %v305 = vmul.f32 %v273, %v79
    %v306 = vmul.f32 %v274, %v79
    %v307 = vmul.f32 %v275, %v84
    %v308 = vmul.f32 %v276, %v84
    %v309 = vmul.f32 %v277, %v84
    %v310 = vmul.f32 %v278, %v84
    %v311 = vmul.f32 %v279, %v84
    %v312 = vmul.f32 %v280, %v84
    %v313 = vmul.f32 %v281, %v84
    %v314 = vmul.f32 %v282, %v84
    %vm315 = vcmask 261120
    %v317 = vsel %vm315, %v49, 0
    %v320 = vsel %vm315, %v50, 0
    %v323 = vsel %vm315, %v51, 0
    %v326 = vsel %vm315, %v52, 0
    %328 = vmatpush.msra.mxu0 0.0
    %329 = vmatpush.msra.mxu0 0.0
    %330 = vmatpush.msra.mxu0 0.0
    %331 = vmatpush.msra.mxu0 0.0
    %332 = vmatpush.msra.mxu0 0.0
    %333 = vmatpush.msra.mxu0 0.0
    %334 = vmatpush.msra.mxu0 0.0
    %335 = vmatpush.msra.mxu0 0.0
    %336 = vmatpush.msra.mxu0 0.0
    %337 = vmatpush.msra.mxu0 0.0
    %338 = vmatpush.msra.mxu0 0.0
    %339 = vmatpush.msra.mxu0 0.0
    %340 = vmatpush.msra.mxu0 %v307
    %341 = vmatpush.msra.mxu0 %v299
    %342 = vmatpush.msra.mxu0 %v291
    %343 = vmatpush.msra.mxu0 %v283
    %344 = vmatmul.f32.gmra.mxu0 %v317
    %v345 = vpop.f32.mrf.mxu0
    %v346 = vadd.f32 0.0, %v345
    %347 = vmatmul.f32.gmra.mxu0 %v320
    %v348 = vpop.f32.mrf.mxu0
    %v349 = vadd.f32 0.0, %v348
    %350 = vmatmul.f32.gmra.mxu0 %v323
    %v351 = vpop.f32.mrf.mxu0
    %v352 = vadd.f32 0.0, %v351
    %353 = vmatmul.f32.gmra.mxu0 %v326
    %v354 = vpop.f32.mrf.mxu0
    %v355 = vadd.f32 0.0, %v354
    %356 = vdwg.mxu0
    %357 = vmatpush.msra.mxu0 0.0
    %358 = vmatpush.msra.mxu0 0.0
    %359 = vmatpush.msra.mxu0 0.0
    %360 = vmatpush.msra.mxu0 0.0
    %361 = vmatpush.msra.mxu0 0.0
    %362 = vmatpush.msra.mxu0 0.0
    %363 = vmatpush.msra.mxu0 0.0
    %364 = vmatpush.msra.mxu0 0.0
    %365 = vmatpush.msra.mxu0 0.0
    %366 = vmatpush.msra.mxu0 0.0
    %367 = vmatpush.msra.mxu0 0.0
    %368 = vmatpush.msra.mxu0 0.0
    %369 = vmatpush.msra.mxu0 %v308
    %370 = vmatpush.msra.mxu0 %v300
    %371 = vmatpush.msra.mxu0 %v292
    %372 = vmatpush.msra.mxu0 %v284
    %373 = vmatmul.f32.gmra.mxu0 %v317
    %v374 = vpop.f32.mrf.mxu0
    %v375 = vadd.f32 0.0, %v374
    %376 = vmatmul.f32.gmra.mxu0 %v320
    %v377 = vpop.f32.mrf.mxu0
    %v378 = vadd.f32 0.0, %v377
    %379 = vmatmul.f32.gmra.mxu0 %v323
    %v380 = vpop.f32.mrf.mxu0
    %v381 = vadd.f32 0.0, %v380
    %382 = vmatmul.f32.gmra.mxu0 %v326
    %v383 = vpop.f32.mrf.mxu0
    %v384 = vadd.f32 0.0, %v383
    %385 = vdwg.mxu0
    %386 = vmatpush.msra.mxu0 0.0
    %387 = vmatpush.msra.mxu0 0.0
    %388 = vmatpush.msra.mxu0 0.0
    %389 = vmatpush.msra.mxu0 0.0
    %390 = vmatpush.msra.mxu0 0.0
    %391 = vmatpush.msra.mxu0 0.0
    %392 = vmatpush.msra.mxu0 0.0
    %393 = vmatpush.msra.mxu0 0.0
    %394 = vmatpush.msra.mxu0 0.0
    %395 = vmatpush.msra.mxu0 0.0
    %396 = vmatpush.msra.mxu0 0.0
    %397 = vmatpush.msra.mxu0 0.0
    %398 = vmatpush.msra.mxu0 %v309
    %399 = vmatpush.msra.mxu0 %v301
    %400 = vmatpush.msra.mxu0 %v293
    %401 = vmatpush.msra.mxu0 %v285
    %402 = vmatmul.f32.gmra.mxu0 %v317
    %v403 = vpop.f32.mrf.mxu0
    %v404 = vadd.f32 0.0, %v403
    %405 = vmatmul.f32.gmra.mxu0 %v320
    %v406 = vpop.f32.mrf.mxu0
    %v407 = vadd.f32 0.0, %v406
    %408 = vmatmul.f32.gmra.mxu0 %v323
    %v409 = vpop.f32.mrf.mxu0
    %v410 = vadd.f32 0.0, %v409
    %411 = vmatmul.f32.gmra.mxu0 %v326
    %v412 = vpop.f32.mrf.mxu0
    %v413 = vadd.f32 0.0, %v412
    %414 = vdwg.mxu0
    %415 = vmatpush.msra.mxu0 0.0
    %416 = vmatpush.msra.mxu0 0.0
    %417 = vmatpush.msra.mxu0 0.0
    %418 = vmatpush.msra.mxu0 0.0
    %419 = vmatpush.msra.mxu0 0.0
    %420 = vmatpush.msra.mxu0 0.0
    %421 = vmatpush.msra.mxu0 0.0
    %422 = vmatpush.msra.mxu0 0.0
    %423 = vmatpush.msra.mxu0 0.0
    %424 = vmatpush.msra.mxu0 0.0
    %425 = vmatpush.msra.mxu0 0.0
    %426 = vmatpush.msra.mxu0 0.0
    %427 = vmatpush.msra.mxu0 %v310
    %428 = vmatpush.msra.mxu0 %v302
    %429 = vmatpush.msra.mxu0 %v294
    %430 = vmatpush.msra.mxu0 %v286
    %431 = vmatmul.f32.gmra.mxu0 %v317
    %v432 = vpop.f32.mrf.mxu0
    %v433 = vadd.f32 0.0, %v432
    %434 = vmatmul.f32.gmra.mxu0 %v320
    %v435 = vpop.f32.mrf.mxu0
    %v436 = vadd.f32 0.0, %v435
    %437 = vmatmul.f32.gmra.mxu0 %v323
    %v438 = vpop.f32.mrf.mxu0
    %v439 = vadd.f32 0.0, %v438
    %440 = vmatmul.f32.gmra.mxu0 %v326
    %v441 = vpop.f32.mrf.mxu0
    %v442 = vadd.f32 0.0, %v441
    %443 = vdwg.mxu0
    %444 = vmatpush.msra.mxu0 0.0
    %445 = vmatpush.msra.mxu0 0.0
    %446 = vmatpush.msra.mxu0 0.0
    %447 = vmatpush.msra.mxu0 0.0
    %448 = vmatpush.msra.mxu0 0.0
    %449 = vmatpush.msra.mxu0 0.0
    %450 = vmatpush.msra.mxu0 0.0
    %451 = vmatpush.msra.mxu0 0.0
    %452 = vmatpush.msra.mxu0 0.0
    %453 = vmatpush.msra.mxu0 0.0
    %454 = vmatpush.msra.mxu0 0.0
    %455 = vmatpush.msra.mxu0 0.0
    %456 = vmatpush.msra.mxu0 %v311
    %457 = vmatpush.msra.mxu0 %v303
    %458 = vmatpush.msra.mxu0 %v295
    %459 = vmatpush.msra.mxu0 %v287
    %460 = vmatmul.f32.gmra.mxu0 %v317
    %v461 = vpop.f32.mrf.mxu0
    %v462 = vadd.f32 0.0, %v461
    %463 = vmatmul.f32.gmra.mxu0 %v320
    %v464 = vpop.f32.mrf.mxu0
    %v465 = vadd.f32 0.0, %v464
    %466 = vmatmul.f32.gmra.mxu0 %v323
    %v467 = vpop.f32.mrf.mxu0
    %v468 = vadd.f32 0.0, %v467
    %469 = vmatmul.f32.gmra.mxu0 %v326
    %v470 = vpop.f32.mrf.mxu0
    %v471 = vadd.f32 0.0, %v470
    %472 = vdwg.mxu0
    %473 = vmatpush.msra.mxu0 0.0
    %474 = vmatpush.msra.mxu0 0.0
    %475 = vmatpush.msra.mxu0 0.0
    %476 = vmatpush.msra.mxu0 0.0
    %477 = vmatpush.msra.mxu0 0.0
    %478 = vmatpush.msra.mxu0 0.0
    %479 = vmatpush.msra.mxu0 0.0
    %480 = vmatpush.msra.mxu0 0.0
    %481 = vmatpush.msra.mxu0 0.0
    %482 = vmatpush.msra.mxu0 0.0
    %483 = vmatpush.msra.mxu0 0.0
    %484 = vmatpush.msra.mxu0 0.0
    %485 = vmatpush.msra.mxu0 %v312
    %486 = vmatpush.msra.mxu0 %v304
    %487 = vmatpush.msra.mxu0 %v296
    %488 = vmatpush.msra.mxu0 %v288
    %489 = vmatmul.f32.gmra.mxu0 %v317
    %v490 = vpop.f32.mrf.mxu0
    %v491 = vadd.f32 0.0, %v490
    %492 = vmatmul.f32.gmra.mxu0 %v320
    %v493 = vpop.f32.mrf.mxu0
    %v494 = vadd.f32 0.0, %v493
    %495 = vmatmul.f32.gmra.mxu0 %v323
    %v496 = vpop.f32.mrf.mxu0
    %v497 = vadd.f32 0.0, %v496
    %498 = vmatmul.f32.gmra.mxu0 %v326
    %v499 = vpop.f32.mrf.mxu0
    %v500 = vadd.f32 0.0, %v499
    %501 = vdwg.mxu0
    %502 = vmatpush.msra.mxu0 0.0
    %503 = vmatpush.msra.mxu0 0.0
    %504 = vmatpush.msra.mxu0 0.0
    %505 = vmatpush.msra.mxu0 0.0
    %506 = vmatpush.msra.mxu0 0.0
    %507 = vmatpush.msra.mxu0 0.0
    %508 = vmatpush.msra.mxu0 0.0
    %509 = vmatpush.msra.mxu0 0.0
    %510 = vmatpush.msra.mxu0 0.0
    %511 = vmatpush.msra.mxu0 0.0
    %512 = vmatpush.msra.mxu0 0.0
    %513 = vmatpush.msra.mxu0 0.0
    %514 = vmatpush.msra.mxu0 %v313
    %515 = vmatpush.msra.mxu0 %v305
    %516 = vmatpush.msra.mxu0 %v297
    %517 = vmatpush.msra.mxu0 %v289
    %518 = vmatmul.f32.gmra.mxu0 %v317
    %v519 = vpop.f32.mrf.mxu0
    %v520 = vadd.f32 0.0, %v519
    %521 = vmatmul.f32.gmra.mxu0 %v320
    %v522 = vpop.f32.mrf.mxu0
    %v523 = vadd.f32 0.0, %v522
    %524 = vmatmul.f32.gmra.mxu0 %v323
    %v525 = vpop.f32.mrf.mxu0
    %v526 = vadd.f32 0.0, %v525
    %527 = vmatmul.f32.gmra.mxu0 %v326
    %v528 = vpop.f32.mrf.mxu0
    %v529 = vadd.f32 0.0, %v528
    %530 = vdwg.mxu0
    %531 = vmatpush.msra.mxu0 0.0
    %532 = vmatpush.msra.mxu0 0.0
    %533 = vmatpush.msra.mxu0 0.0
    %534 = vmatpush.msra.mxu0 0.0
    %535 = vmatpush.msra.mxu0 0.0
    %536 = vmatpush.msra.mxu0 0.0
    %537 = vmatpush.msra.mxu0 0.0
    %538 = vmatpush.msra.mxu0 0.0
    %539 = vmatpush.msra.mxu0 0.0
    %540 = vmatpush.msra.mxu0 0.0
    %541 = vmatpush.msra.mxu0 0.0
    %542 = vmatpush.msra.mxu0 0.0
    %543 = vmatpush.msra.mxu0 %v314
    %544 = vmatpush.msra.mxu0 %v306
    %545 = vmatpush.msra.mxu0 %v298
    %546 = vmatpush.msra.mxu0 %v290
    %547 = vmatmul.f32.gmra.mxu0 %v317
    %v548 = vpop.f32.mrf.mxu0
    %v549 = vadd.f32 0.0, %v548
    %550 = vmatmul.f32.gmra.mxu0 %v320
    %v551 = vpop.f32.mrf.mxu0
    %v552 = vadd.f32 0.0, %v551
    %553 = vmatmul.f32.gmra.mxu0 %v323
    %v554 = vpop.f32.mrf.mxu0
    %v555 = vadd.f32 0.0, %v554
    %556 = vmatmul.f32.gmra.mxu0 %v326
    %v557 = vpop.f32.mrf.mxu0
    %v558 = vadd.f32 0.0, %v557
    %559 = vdwg.mxu0
    %561 = vset.pattern.permute.xlu0 0
    %562 = vperm.xlu0 %561, %v53
    %v563 = vpop.permute.xlu0 %562
    %566 = vset.pattern.permute.xlu0 0
    %567 = vperm.xlu0 %566, %v54
    %v568 = vpop.permute.xlu0 %567
    %571 = vset.pattern.permute.xlu0 0
    %572 = vperm.xlu0 %571, %v55
    %v573 = vpop.permute.xlu0 %572
    %576 = vset.pattern.permute.xlu0 0
    %577 = vperm.xlu0 %576, %v56
    %v578 = vpop.permute.xlu0 %577
    %580 = vmatpush.msra.mxu0 0.0
    %581 = vmatpush.msra.mxu0 0.0
    %582 = vmatpush.msra.mxu0 0.0
    %583 = vmatpush.msra.mxu0 0.0
    %584 = vmatpush.msra.mxu0 0.0
    %585 = vmatpush.msra.mxu0 0.0
    %586 = vmatpush.msra.mxu0 0.0
    %587 = vmatpush.msra.mxu0 0.0
    %588 = vmatpush.msra.mxu0 0.0
    %589 = vmatpush.msra.mxu0 0.0
    %590 = vmatpush.msra.mxu0 0.0
    %591 = vmatpush.msra.mxu0 0.0
    %592 = vmatpush.msra.mxu0 %v211
    %593 = vmatpush.msra.mxu0 %v203
    %594 = vmatpush.msra.mxu0 %v195
    %595 = vmatpush.msra.mxu0 %v187
    %596 = vmatmul.f32.gmra.mxu0 %v317
    %v597 = vpop.f32.mrf.mxu0
    %v598 = vadd.f32 %v563, %v597
    %599 = vmatmul.f32.gmra.mxu0 %v320
    %v600 = vpop.f32.mrf.mxu0
    %v601 = vadd.f32 %v568, %v600
    %602 = vmatmul.f32.gmra.mxu0 %v323
    %v603 = vpop.f32.mrf.mxu0
    %v604 = vadd.f32 %v573, %v603
    %605 = vmatmul.f32.gmra.mxu0 %v326
    %v606 = vpop.f32.mrf.mxu0
    %v607 = vadd.f32 %v578, %v606
    %608 = vdwg.mxu0
    %609 = vmatpush.msra.mxu0 0.0
    %610 = vmatpush.msra.mxu0 0.0
    %611 = vmatpush.msra.mxu0 0.0
    %612 = vmatpush.msra.mxu0 0.0
    %613 = vmatpush.msra.mxu0 0.0
    %614 = vmatpush.msra.mxu0 0.0
    %615 = vmatpush.msra.mxu0 0.0
    %616 = vmatpush.msra.mxu0 0.0
    %617 = vmatpush.msra.mxu0 0.0
    %618 = vmatpush.msra.mxu0 0.0
    %619 = vmatpush.msra.mxu0 0.0
    %620 = vmatpush.msra.mxu0 0.0
    %621 = vmatpush.msra.mxu0 %v212
    %622 = vmatpush.msra.mxu0 %v204
    %623 = vmatpush.msra.mxu0 %v196
    %624 = vmatpush.msra.mxu0 %v188
    %625 = vmatmul.f32.gmra.mxu0 %v317
    %v626 = vpop.f32.mrf.mxu0
    %v627 = vadd.f32 %v563, %v626
    %628 = vmatmul.f32.gmra.mxu0 %v320
    %v629 = vpop.f32.mrf.mxu0
    %v630 = vadd.f32 %v568, %v629
    %631 = vmatmul.f32.gmra.mxu0 %v323
    %v632 = vpop.f32.mrf.mxu0
    %v633 = vadd.f32 %v573, %v632
    %634 = vmatmul.f32.gmra.mxu0 %v326
    %v635 = vpop.f32.mrf.mxu0
    %v636 = vadd.f32 %v578, %v635
    %637 = vdwg.mxu0
    %638 = vmatpush.msra.mxu0 0.0
    %639 = vmatpush.msra.mxu0 0.0
    %640 = vmatpush.msra.mxu0 0.0
    %641 = vmatpush.msra.mxu0 0.0
    %642 = vmatpush.msra.mxu0 0.0
    %643 = vmatpush.msra.mxu0 0.0
    %644 = vmatpush.msra.mxu0 0.0
    %645 = vmatpush.msra.mxu0 0.0
    %646 = vmatpush.msra.mxu0 0.0
    %647 = vmatpush.msra.mxu0 0.0
    %648 = vmatpush.msra.mxu0 0.0
    %649 = vmatpush.msra.mxu0 0.0
    %650 = vmatpush.msra.mxu0 %v213
    %651 = vmatpush.msra.mxu0 %v205
    %652 = vmatpush.msra.mxu0 %v197
    %653 = vmatpush.msra.mxu0 %v189
    %654 = vmatmul.f32.gmra.mxu0 %v317
    %v655 = vpop.f32.mrf.mxu0
    %v656 = vadd.f32 %v563, %v655
    %657 = vmatmul.f32.gmra.mxu0 %v320
    %v658 = vpop.f32.mrf.mxu0
    %v659 = vadd.f32 %v568, %v658
    %660 = vmatmul.f32.gmra.mxu0 %v323
    %v661 = vpop.f32.mrf.mxu0
    %v662 = vadd.f32 %v573, %v661
    %663 = vmatmul.f32.gmra.mxu0 %v326
    %v664 = vpop.f32.mrf.mxu0
    %v665 = vadd.f32 %v578, %v664
    %666 = vdwg.mxu0
    %667 = vmatpush.msra.mxu0 0.0
    %668 = vmatpush.msra.mxu0 0.0
    %669 = vmatpush.msra.mxu0 0.0
    %670 = vmatpush.msra.mxu0 0.0
    %671 = vmatpush.msra.mxu0 0.0
    %672 = vmatpush.msra.mxu0 0.0
    %673 = vmatpush.msra.mxu0 0.0
    %674 = vmatpush.msra.mxu0 0.0
    %675 = vmatpush.msra.mxu0 0.0
    %676 = vmatpush.msra.mxu0 0.0
    %677 = vmatpush.msra.mxu0 0.0
    %678 = vmatpush.msra.mxu0 0.0
    %679 = vmatpush.msra.mxu0 %v214
    %680 = vmatpush.msra.mxu0 %v206
    %681 = vmatpush.msra.mxu0 %v198
    %682 = vmatpush.msra.mxu0 %v190
    %683 = vmatmul.f32.gmra.mxu0 %v317
    %v684 = vpop.f32.mrf.mxu0
    %v685 = vadd.f32 %v563, %v684
    %686 = vmatmul.f32.gmra.mxu0 %v320
    %v687 = vpop.f32.mrf.mxu0
    %v688 = vadd.f32 %v568, %v687
    %689 = vmatmul.f32.gmra.mxu0 %v323
    %v690 = vpop.f32.mrf.mxu0
    %v691 = vadd.f32 %v573, %v690
    %692 = vmatmul.f32.gmra.mxu0 %v326
    %v693 = vpop.f32.mrf.mxu0
    %v694 = vadd.f32 %v578, %v693
    %695 = vdwg.mxu0
    %696 = vmatpush.msra.mxu0 0.0
    %697 = vmatpush.msra.mxu0 0.0
    %698 = vmatpush.msra.mxu0 0.0
    %699 = vmatpush.msra.mxu0 0.0
    %700 = vmatpush.msra.mxu0 0.0
    %701 = vmatpush.msra.mxu0 0.0
    %702 = vmatpush.msra.mxu0 0.0
    %703 = vmatpush.msra.mxu0 0.0
    %704 = vmatpush.msra.mxu0 0.0
    %705 = vmatpush.msra.mxu0 0.0
    %706 = vmatpush.msra.mxu0 0.0
    %707 = vmatpush.msra.mxu0 0.0
    %708 = vmatpush.msra.mxu0 %v215
    %709 = vmatpush.msra.mxu0 %v207
    %710 = vmatpush.msra.mxu0 %v199
    %711 = vmatpush.msra.mxu0 %v191
    %712 = vmatmul.f32.gmra.mxu0 %v317
    %v713 = vpop.f32.mrf.mxu0
    %v714 = vadd.f32 %v563, %v713
    %715 = vmatmul.f32.gmra.mxu0 %v320
    %v716 = vpop.f32.mrf.mxu0
    %v717 = vadd.f32 %v568, %v716
    %718 = vmatmul.f32.gmra.mxu0 %v323
    %v719 = vpop.f32.mrf.mxu0
    %v720 = vadd.f32 %v573, %v719
    %721 = vmatmul.f32.gmra.mxu0 %v326
    %v722 = vpop.f32.mrf.mxu0
    %v723 = vadd.f32 %v578, %v722
    %724 = vdwg.mxu0
    %725 = vmatpush.msra.mxu0 0.0
    %726 = vmatpush.msra.mxu0 0.0
    %727 = vmatpush.msra.mxu0 0.0
    %728 = vmatpush.msra.mxu0 0.0
    %729 = vmatpush.msra.mxu0 0.0
    %730 = vmatpush.msra.mxu0 0.0
    %731 = vmatpush.msra.mxu0 0.0
    %732 = vmatpush.msra.mxu0 0.0
    %733 = vmatpush.msra.mxu0 0.0
    %734 = vmatpush.msra.mxu0 0.0
    %735 = vmatpush.msra.mxu0 0.0
    %736 = vmatpush.msra.mxu0 0.0
    %737 = vmatpush.msra.mxu0 %v216
    %738 = vmatpush.msra.mxu0 %v208
    %739 = vmatpush.msra.mxu0 %v200
    %740 = vmatpush.msra.mxu0 %v192
    %741 = vmatmul.f32.gmra.mxu0 %v317
    %v742 = vpop.f32.mrf.mxu0
    %v743 = vadd.f32 %v563, %v742
    %744 = vmatmul.f32.gmra.mxu0 %v320
    %v745 = vpop.f32.mrf.mxu0
    %v746 = vadd.f32 %v568, %v745
    %747 = vmatmul.f32.gmra.mxu0 %v323
    %v748 = vpop.f32.mrf.mxu0
    %v749 = vadd.f32 %v573, %v748
    %750 = vmatmul.f32.gmra.mxu0 %v326
    %v751 = vpop.f32.mrf.mxu0
    %v752 = vadd.f32 %v578, %v751
    %753 = vdwg.mxu0
    %754 = vmatpush.msra.mxu0 0.0
    %755 = vmatpush.msra.mxu0 0.0
    %756 = vmatpush.msra.mxu0 0.0
    %757 = vmatpush.msra.mxu0 0.0
    %758 = vmatpush.msra.mxu0 0.0
    %759 = vmatpush.msra.mxu0 0.0
    %760 = vmatpush.msra.mxu0 0.0
    %761 = vmatpush.msra.mxu0 0.0
    %762 = vmatpush.msra.mxu0 0.0
    %763 = vmatpush.msra.mxu0 0.0
    %764 = vmatpush.msra.mxu0 0.0
    %765 = vmatpush.msra.mxu0 0.0
    %766 = vmatpush.msra.mxu0 %v217
    %767 = vmatpush.msra.mxu0 %v209
    %768 = vmatpush.msra.mxu0 %v201
    %769 = vmatpush.msra.mxu0 %v193
    %770 = vmatmul.f32.gmra.mxu0 %v317
    %v771 = vpop.f32.mrf.mxu0
    %v772 = vadd.f32 %v563, %v771
    %773 = vmatmul.f32.gmra.mxu0 %v320
    %v774 = vpop.f32.mrf.mxu0
    %v775 = vadd.f32 %v568, %v774
    %776 = vmatmul.f32.gmra.mxu0 %v323
    %v777 = vpop.f32.mrf.mxu0
    %v778 = vadd.f32 %v573, %v777
    %779 = vmatmul.f32.gmra.mxu0 %v326
    %v780 = vpop.f32.mrf.mxu0
    %v781 = vadd.f32 %v578, %v780
    %782 = vdwg.mxu0
    %783 = vmatpush.msra.mxu0 0.0
    %784 = vmatpush.msra.mxu0 0.0
    %785 = vmatpush.msra.mxu0 0.0
    %786 = vmatpush.msra.mxu0 0.0
    %787 = vmatpush.msra.mxu0 0.0
    %788 = vmatpush.msra.mxu0 0.0
    %789 = vmatpush.msra.mxu0 0.0
    %790 = vmatpush.msra.mxu0 0.0
    %791 = vmatpush.msra.mxu0 0.0
    %792 = vmatpush.msra.mxu0 0.0
    %793 = vmatpush.msra.mxu0 0.0
    %794 = vmatpush.msra.mxu0 0.0
    %795 = vmatpush.msra.mxu0 %v218
    %796 = vmatpush.msra.mxu0 %v210
    %797 = vmatpush.msra.mxu0 %v202
    %798 = vmatpush.msra.mxu0 %v194
    %799 = vmatmul.f32.gmra.mxu0 %v317
    %v800 = vpop.f32.mrf.mxu0
    %v801 = vadd.f32 %v563, %v800
    %802 = vmatmul.f32.gmra.mxu0 %v320
    %v803 = vpop.f32.mrf.mxu0
    %v804 = vadd.f32 %v568, %v803
    %805 = vmatmul.f32.gmra.mxu0 %v323
    %v806 = vpop.f32.mrf.mxu0
    %v807 = vadd.f32 %v573, %v806
    %808 = vmatmul.f32.gmra.mxu0 %v326
    %v809 = vpop.f32.mrf.mxu0
    %v810 = vadd.f32 %v578, %v809
    %811 = vdwg.mxu0
    %v812 = vtanh.pop %v598
    %v813 = vtanh.pop %v627
    %v814 = vtanh.pop %v656
    %v815 = vtanh.pop %v685
    %v816 = vtanh.pop %v714
    %v817 = vtanh.pop %v743
    %v818 = vtanh.pop %v772
    %v819 = vtanh.pop %v801
    %v820 = vtanh.pop %v601
    %v821 = vtanh.pop %v630
    %v822 = vtanh.pop %v659
    %v823 = vtanh.pop %v688
    %v824 = vtanh.pop %v717
    %v825 = vtanh.pop %v746
    %v826 = vtanh.pop %v775
    %v827 = vtanh.pop %v804
    %v828 = vtanh.pop %v604
    %v829 = vtanh.pop %v633
    %v830 = vtanh.pop %v662
    %v831 = vtanh.pop %v691
    %v832 = vtanh.pop %v720
    %v833 = vtanh.pop %v749
    %v834 = vtanh.pop %v778
    %v835 = vtanh.pop %v807
    %v836 = vtanh.pop %v607
    %v837 = vtanh.pop %v636
    %v838 = vtanh.pop %v665
    %v839 = vtanh.pop %v694
    %v840 = vtanh.pop %v723
    %v841 = vtanh.pop %v752
    %v842 = vtanh.pop %v781
    %v843 = vtanh.pop %v810
    %v844 = vmul.f32 %v812, %v812
    %v845 = vmul.f32 %v813, %v813
    %v846 = vmul.f32 %v814, %v814
    %v847 = vmul.f32 %v815, %v815
    %v848 = vmul.f32 %v816, %v816
    %v849 = vmul.f32 %v817, %v817
    %v850 = vmul.f32 %v818, %v818
    %v851 = vmul.f32 %v819, %v819
    %v852 = vmul.f32 %v820, %v820
    %v853 = vmul.f32 %v821, %v821
    %v854 = vmul.f32 %v822, %v822
    %v855 = vmul.f32 %v823, %v823
    %v856 = vmul.f32 %v824, %v824
    %v857 = vmul.f32 %v825, %v825
    %v858 = vmul.f32 %v826, %v826
    %v859 = vmul.f32 %v827, %v827
    %v860 = vmul.f32 %v828, %v828
    %v861 = vmul.f32 %v829, %v829
    %v862 = vmul.f32 %v830, %v830
    %v863 = vmul.f32 %v831, %v831
    %v864 = vmul.f32 %v832, %v832
    %v865 = vmul.f32 %v833, %v833
    %v866 = vmul.f32 %v834, %v834
    %v867 = vmul.f32 %v835, %v835
    %v868 = vmul.f32 %v836, %v836
    %v869 = vmul.f32 %v837, %v837
    %v870 = vmul.f32 %v838, %v838
    %v871 = vmul.f32 %v839, %v839
    %v872 = vmul.f32 %v840, %v840
    %v873 = vmul.f32 %v841, %v841
    %v874 = vmul.f32 %v842, %v842
    %v875 = vmul.f32 %v843, %v843
    %v876 = vsub.f32 1.0, %v844
    %v877 = vsub.f32 1.0, %v845
    %v878 = vsub.f32 1.0, %v846
    %v879 = vsub.f32 1.0, %v847
    %v880 = vsub.f32 1.0, %v848
    %v881 = vsub.f32 1.0, %v849
    %v882 = vsub.f32 1.0, %v850
    %v883 = vsub.f32 1.0, %v851
    %v884 = vsub.f32 1.0, %v852
    %v885 = vsub.f32 1.0, %v853
    %v886 = vsub.f32 1.0, %v854
    %v887 = vsub.f32 1.0, %v855
    %v888 = vsub.f32 1.0, %v856
    %v889 = vsub.f32 1.0, %v857
    %v890 = vsub.f32 1.0, %v858
    %v891 = vsub.f32 1.0, %v859
    %v892 = vsub.f32 1.0, %v860
    %v893 = vsub.f32 1.0, %v861
    %v894 = vsub.f32 1.0, %v862
    %v895 = vsub.f32 1.0, %v863
    %v896 = vsub.f32 1.0, %v864
    %v897 = vsub.f32 1.0, %v865
    %v898 = vsub.f32 1.0, %v866
    %v899 = vsub.f32 1.0, %v867
    %v900 = vsub.f32 1.0, %v868
    %v901 = vsub.f32 1.0, %v869
    %v902 = vsub.f32 1.0, %v870
    %v903 = vsub.f32 1.0, %v871
    %v904 = vsub.f32 1.0, %v872
    %v905 = vsub.f32 1.0, %v873
    %v906 = vsub.f32 1.0, %v874
    %v907 = vsub.f32 1.0, %v875
    %v908 = vmul.f32 %v876, %v346
    %v909 = vmul.f32 %v877, %v375
    %v910 = vmul.f32 %v878, %v404
    %v911 = vmul.f32 %v879, %v433
    %v912 = vmul.f32 %v880, %v462
    %v913 = vmul.f32 %v881, %v491
    %v914 = vmul.f32 %v882, %v520
    %v915 = vmul.f32 %v883, %v549
    %v916 = vmul.f32 %v884, %v349
    %v917 = vmul.f32 %v885, %v378
    %v918 = vmul.f32 %v886, %v407
    %v919 = vmul.f32 %v887, %v436
    %v920 = vmul.f32 %v888, %v465
    %v921 = vmul.f32 %v889, %v494
    %v922 = vmul.f32 %v890, %v523
    %v923 = vmul.f32 %v891, %v552
    %v924 = vmul.f32 %v892, %v352
    %v925 = vmul.f32 %v893, %v381
    %v926 = vmul.f32 %v894, %v410
    %v927 = vmul.f32 %v895, %v439
    %v928 = vmul.f32 %v896, %v468
    %v929 = vmul.f32 %v897, %v497
    %v930 = vmul.f32 %v898, %v526
    %v931 = vmul.f32 %v899, %v555
    %v932 = vmul.f32 %v900, %v355
    %v933 = vmul.f32 %v901, %v384
    %v934 = vmul.f32 %v902, %v413
    %v935 = vmul.f32 %v903, %v442
    %v936 = vmul.f32 %v904, %v471
    %v937 = vmul.f32 %v905, %v500
    %v938 = vmul.f32 %v906, %v529
    %v939 = vmul.f32 %v907, %v558
    %941 = vset.pattern.permute.xlu0 0
    %942 = vperm.xlu0 %941, %v57
    %v943 = vpop.permute.xlu0 %942
    %946 = vset.pattern.permute.xlu0 0
    %947 = vperm.xlu0 %946, %v58
    %v948 = vpop.permute.xlu0 %947
    %951 = vset.pattern.permute.xlu0 0
    %952 = vperm.xlu0 %951, %v59
    %v953 = vpop.permute.xlu0 %952
    %956 = vset.pattern.permute.xlu0 0
    %957 = vperm.xlu0 %956, %v60
    %v958 = vpop.permute.xlu0 %957
    %v960 = vmul.f32 %v812, %v943
    %v961 = vmul.f32 %v813, %v943
    %v962 = vmul.f32 %v814, %v943
    %v963 = vmul.f32 %v815, %v943
    %v964 = vmul.f32 %v816, %v943
    %v965 = vmul.f32 %v817, %v943
    %v966 = vmul.f32 %v818, %v943
    %v967 = vmul.f32 %v819, %v943
    %v968 = vmul.f32 %v820, %v948
    %v969 = vmul.f32 %v821, %v948
    %v970 = vmul.f32 %v822, %v948
    %v971 = vmul.f32 %v823, %v948
    %v972 = vmul.f32 %v824, %v948
    %v973 = vmul.f32 %v825, %v948
    %v974 = vmul.f32 %v826, %v948
    %v975 = vmul.f32 %v827, %v948
    %v976 = vmul.f32 %v828, %v953
    %v977 = vmul.f32 %v829, %v953
    %v978 = vmul.f32 %v830, %v953
    %v979 = vmul.f32 %v831, %v953
    %v980 = vmul.f32 %v832, %v953
    %v981 = vmul.f32 %v833, %v953
    %v982 = vmul.f32 %v834, %v953
    %v983 = vmul.f32 %v835, %v953
    %v984 = vmul.f32 %v836, %v958
    %v985 = vmul.f32 %v837, %v958
    %v986 = vmul.f32 %v838, %v958
    %v987 = vmul.f32 %v839, %v958
    %v988 = vmul.f32 %v840, %v958
    %v989 = vmul.f32 %v841, %v958
    %v990 = vmul.f32 %v842, %v958
    %v991 = vmul.f32 %v843, %v958
    %v992 = vadd.f32 %v960, %v968
    %v993 = vadd.f32 %v992, %v976
    %v994 = vadd.f32 %v993, %v984
    %v995 = vrot.slane %v994, 4
    %v996 = vadd.f32 %v994, %v995
    %v997 = vrot.slane %v996, 2
    %v998 = vadd.f32 %v996, %v997
    %v999 = vrot.slane %v998, 1
    %v1000 = vadd.f32 %v998, %v999
    %v1001 = vadd.f32 %v961, %v969
    %v1002 = vadd.f32 %v1001, %v977
    %v1003 = vadd.f32 %v1002, %v985
    %v1004 = vrot.slane %v1003, 4
    %v1005 = vadd.f32 %v1003, %v1004
    %v1006 = vrot.slane %v1005, 2
    %v1007 = vadd.f32 %v1005, %v1006
    %v1008 = vrot.slane %v1007, 1
    %v1009 = vadd.f32 %v1007, %v1008
    %v1010 = vadd.f32 %v962, %v970
    %v1011 = vadd.f32 %v1010, %v978
    %v1012 = vadd.f32 %v1011, %v986
    %v1013 = vrot.slane %v1012, 4
    %v1014 = vadd.f32 %v1012, %v1013
    %v1015 = vrot.slane %v1014, 2
    %v1016 = vadd.f32 %v1014, %v1015
    %v1017 = vrot.slane %v1016, 1
    %v1018 = vadd.f32 %v1016, %v1017
    %v1019 = vadd.f32 %v963, %v971
    %v1020 = vadd.f32 %v1019, %v979
    %v1021 = vadd.f32 %v1020, %v987
    %v1022 = vrot.slane %v1021, 4
    %v1023 = vadd.f32 %v1021, %v1022
    %v1024 = vrot.slane %v1023, 2
    %v1025 = vadd.f32 %v1023, %v1024
    %v1026 = vrot.slane %v1025, 1
    %v1027 = vadd.f32 %v1025, %v1026
    %v1028 = vadd.f32 %v964, %v972
    %v1029 = vadd.f32 %v1028, %v980
    %v1030 = vadd.f32 %v1029, %v988
    %v1031 = vrot.slane %v1030, 4
    %v1032 = vadd.f32 %v1030, %v1031
    %v1033 = vrot.slane %v1032, 2
    %v1034 = vadd.f32 %v1032, %v1033
    %v1035 = vrot.slane %v1034, 1
    %v1036 = vadd.f32 %v1034, %v1035
    %v1037 = vadd.f32 %v965, %v973
    %v1038 = vadd.f32 %v1037, %v981
    %v1039 = vadd.f32 %v1038, %v989
    %v1040 = vrot.slane %v1039, 4
    %v1041 = vadd.f32 %v1039, %v1040
    %v1042 = vrot.slane %v1041, 2
    %v1043 = vadd.f32 %v1041, %v1042
    %v1044 = vrot.slane %v1043, 1
    %v1045 = vadd.f32 %v1043, %v1044
    %v1046 = vadd.f32 %v966, %v974
    %v1047 = vadd.f32 %v1046, %v982
    %v1048 = vadd.f32 %v1047, %v990
    %v1049 = vrot.slane %v1048, 4
    %v1050 = vadd.f32 %v1048, %v1049
    %v1051 = vrot.slane %v1050, 2
    %v1052 = vadd.f32 %v1050, %v1051
    %v1053 = vrot.slane %v1052, 1
    %v1054 = vadd.f32 %v1052, %v1053
    %v1055 = vadd.f32 %v967, %v975
    %v1056 = vadd.f32 %v1055, %v983
    %v1057 = vadd.f32 %v1056, %v991
    %v1058 = vrot.slane %v1057, 4
    %v1059 = vadd.f32 %v1057, %v1058
    %v1060 = vrot.slane %v1059, 2
    %v1061 = vadd.f32 %v1059, %v1060
    %v1062 = vrot.slane %v1061, 1
    %v1063 = vadd.f32 %v1061, %v1062
    %v1064 = vstv %s61
    %v1065 = vadd.f32 %v1000, %v1064
    %v1066 = vadd.f32 %v1009, %v1064
    %v1067 = vadd.f32 %v1018, %v1064
    %v1068 = vadd.f32 %v1027, %v1064
    %v1069 = vadd.f32 %v1036, %v1064
    %v1070 = vadd.f32 %v1045, %v1064
    %v1071 = vadd.f32 %v1054, %v1064
    %v1072 = vadd.f32 %v1063, %v1064
    %v1073 = vmul.f32 %v908, %v943
    %v1074 = vmul.f32 %v909, %v943
    %v1075 = vmul.f32 %v910, %v943
    %v1076 = vmul.f32 %v911, %v943
    %v1077 = vmul.f32 %v912, %v943
    %v1078 = vmul.f32 %v913, %v943
    %v1079 = vmul.f32 %v914, %v943
    %v1080 = vmul.f32 %v915, %v943
    %v1081 = vmul.f32 %v916, %v948
    %v1082 = vmul.f32 %v917, %v948
    %v1083 = vmul.f32 %v918, %v948
    %v1084 = vmul.f32 %v919, %v948
    %v1085 = vmul.f32 %v920, %v948
    %v1086 = vmul.f32 %v921, %v948
    %v1087 = vmul.f32 %v922, %v948
    %v1088 = vmul.f32 %v923, %v948
    %v1089 = vmul.f32 %v924, %v953
    %v1090 = vmul.f32 %v925, %v953
    %v1091 = vmul.f32 %v926, %v953
    %v1092 = vmul.f32 %v927, %v953
    %v1093 = vmul.f32 %v928, %v953
    %v1094 = vmul.f32 %v929, %v953
    %v1095 = vmul.f32 %v930, %v953
    %v1096 = vmul.f32 %v931, %v953
    %v1097 = vmul.f32 %v932, %v958
    %v1098 = vmul.f32 %v933, %v958
    %v1099 = vmul.f32 %v934, %v958
    %v1100 = vmul.f32 %v935, %v958
    %v1101 = vmul.f32 %v936, %v958
    %v1102 = vmul.f32 %v937, %v958
    %v1103 = vmul.f32 %v938, %v958
    %v1104 = vmul.f32 %v939, %v958
    %v1105 = vadd.f32 %v1073, %v1081
    %v1106 = vadd.f32 %v1105, %v1089
    %v1107 = vadd.f32 %v1106, %v1097
    %v1108 = vrot.slane %v1107, 4
    %v1109 = vadd.f32 %v1107, %v1108
    %v1110 = vrot.slane %v1109, 2
    %v1111 = vadd.f32 %v1109, %v1110
    %v1112 = vrot.slane %v1111, 1
    %v1113 = vadd.f32 %v1111, %v1112
    %v1114 = vadd.f32 %v1074, %v1082
    %v1115 = vadd.f32 %v1114, %v1090
    %v1116 = vadd.f32 %v1115, %v1098
    %v1117 = vrot.slane %v1116, 4
    %v1118 = vadd.f32 %v1116, %v1117
    %v1119 = vrot.slane %v1118, 2
    %v1120 = vadd.f32 %v1118, %v1119
    %v1121 = vrot.slane %v1120, 1
    %v1122 = vadd.f32 %v1120, %v1121
    %v1123 = vadd.f32 %v1075, %v1083
    %v1124 = vadd.f32 %v1123, %v1091
    %v1125 = vadd.f32 %v1124, %v1099
    %v1126 = vrot.slane %v1125, 4
    %v1127 = vadd.f32 %v1125, %v1126
    %v1128 = vrot.slane %v1127, 2
    %v1129 = vadd.f32 %v1127, %v1128
    %v1130 = vrot.slane %v1129, 1
    %v1131 = vadd.f32 %v1129, %v1130
    %v1132 = vadd.f32 %v1076, %v1084
    %v1133 = vadd.f32 %v1132, %v1092
    %v1134 = vadd.f32 %v1133, %v1100
    %v1135 = vrot.slane %v1134, 4
    %v1136 = vadd.f32 %v1134, %v1135
    %v1137 = vrot.slane %v1136, 2
    %v1138 = vadd.f32 %v1136, %v1137
    %v1139 = vrot.slane %v1138, 1
    %v1140 = vadd.f32 %v1138, %v1139
    %v1141 = vadd.f32 %v1077, %v1085
    %v1142 = vadd.f32 %v1141, %v1093
    %v1143 = vadd.f32 %v1142, %v1101
    %v1144 = vrot.slane %v1143, 4
    %v1145 = vadd.f32 %v1143, %v1144
    %v1146 = vrot.slane %v1145, 2
    %v1147 = vadd.f32 %v1145, %v1146
    %v1148 = vrot.slane %v1147, 1
    %v1149 = vadd.f32 %v1147, %v1148
    %v1150 = vadd.f32 %v1078, %v1086
    %v1151 = vadd.f32 %v1150, %v1094
    %v1152 = vadd.f32 %v1151, %v1102
    %v1153 = vrot.slane %v1152, 4
    %v1154 = vadd.f32 %v1152, %v1153
    %v1155 = vrot.slane %v1154, 2
    %v1156 = vadd.f32 %v1154, %v1155
    %v1157 = vrot.slane %v1156, 1
    %v1158 = vadd.f32 %v1156, %v1157
    %v1159 = vadd.f32 %v1079, %v1087
    %v1160 = vadd.f32 %v1159, %v1095
    %v1161 = vadd.f32 %v1160, %v1103
    %v1162 = vrot.slane %v1161, 4
    %v1163 = vadd.f32 %v1161, %v1162
    %v1164 = vrot.slane %v1163, 2
    %v1165 = vadd.f32 %v1163, %v1164
    %v1166 = vrot.slane %v1165, 1
    %v1167 = vadd.f32 %v1165, %v1166
    %v1168 = vadd.f32 %v1080, %v1088
    %v1169 = vadd.f32 %v1168, %v1096
    %v1170 = vadd.f32 %v1169, %v1104
    %v1171 = vrot.slane %v1170, 4
    %v1172 = vadd.f32 %v1170, %v1171
    %v1173 = vrot.slane %v1172, 2
    %v1174 = vadd.f32 %v1172, %v1173
    %v1175 = vrot.slane %v1174, 1
    %v1176 = vadd.f32 %v1174, %v1175
    %v1177 = vmul.f32 %v1065, %v1065
    %v1178 = vmul.f32 %v1066, %v1066
    %v1179 = vmul.f32 %v1067, %v1067
    %v1180 = vmul.f32 %v1068, %v1068
    %v1181 = vmul.f32 %v1069, %v1069
    %v1182 = vmul.f32 %v1070, %v1070
    %v1183 = vmul.f32 %v1071, %v1071
    %v1184 = vmul.f32 %v1072, %v1072
    %v1185 = vmul.f32 %v1177, %v1065
    %v1186 = vmul.f32 %v1178, %v1066
    %v1187 = vmul.f32 %v1179, %v1067
    %v1188 = vmul.f32 %v1180, %v1068
    %v1189 = vmul.f32 %v1181, %v1069
    %v1190 = vmul.f32 %v1182, %v1070
    %v1191 = vmul.f32 %v1183, %v1071
    %v1192 = vmul.f32 %v1184, %v1072
    %v1193 = vstv %s63
    %v1194 = vmul.f32 %v1193, %v1065
    %v1195 = vmul.f32 %v1193, %v1066
    %v1196 = vmul.f32 %v1193, %v1067
    %v1197 = vmul.f32 %v1193, %v1068
    %v1198 = vmul.f32 %v1193, %v1069
    %v1199 = vmul.f32 %v1193, %v1070
    %v1200 = vmul.f32 %v1193, %v1071
    %v1201 = vmul.f32 %v1193, %v1072
    %v1202 = vstv %s62
    %v1203 = vadd.f32 %v1202, %v1194
    %v1204 = vadd.f32 %v1202, %v1195
    %v1205 = vadd.f32 %v1202, %v1196
    %v1206 = vadd.f32 %v1202, %v1197
    %v1207 = vadd.f32 %v1202, %v1198
    %v1208 = vadd.f32 %v1202, %v1199
    %v1209 = vadd.f32 %v1202, %v1200
    %v1210 = vadd.f32 %v1202, %v1201
    %v1211 = vstv %s64
    %v1212 = vmul.f32 %v1211, %v1177
    %v1213 = vmul.f32 %v1211, %v1178
    %v1214 = vmul.f32 %v1211, %v1179
    %v1215 = vmul.f32 %v1211, %v1180
    %v1216 = vmul.f32 %v1211, %v1181
    %v1217 = vmul.f32 %v1211, %v1182
    %v1218 = vmul.f32 %v1211, %v1183
    %v1219 = vmul.f32 %v1211, %v1184
    %v1220 = vadd.f32 %v1203, %v1212
    %v1221 = vadd.f32 %v1204, %v1213
    %v1222 = vadd.f32 %v1205, %v1214
    %v1223 = vadd.f32 %v1206, %v1215
    %v1224 = vadd.f32 %v1207, %v1216
    %v1225 = vadd.f32 %v1208, %v1217
    %v1226 = vadd.f32 %v1209, %v1218
    %v1227 = vadd.f32 %v1210, %v1219
    %v1228 = vstv %s65
    %v1229 = vmul.f32 %v1228, %v1185
    %v1230 = vmul.f32 %v1228, %v1186
    %v1231 = vmul.f32 %v1228, %v1187
    %v1232 = vmul.f32 %v1228, %v1188
    %v1233 = vmul.f32 %v1228, %v1189
    %v1234 = vmul.f32 %v1228, %v1190
    %v1235 = vmul.f32 %v1228, %v1191
    %v1236 = vmul.f32 %v1228, %v1192
    %v1237 = vadd.f32 %v1220, %v1229
    %v1238 = vadd.f32 %v1221, %v1230
    %v1239 = vadd.f32 %v1222, %v1231
    %v1240 = vadd.f32 %v1223, %v1232
    %v1241 = vadd.f32 %v1224, %v1233
    %v1242 = vadd.f32 %v1225, %v1234
    %v1243 = vadd.f32 %v1226, %v1235
    %v1244 = vadd.f32 %v1227, %v1236
    %vm1245 = vcmask 1040384
    %v1246 = vsel %vm1245, 1.0, %v1065
    %v1247 = vsel %vm1245, 1.0, %v1066
    %v1248 = vsel %vm1245, 1.0, %v1067
    %v1249 = vsel %vm1245, 1.0, %v1068
    %v1250 = vsel %vm1245, 1.0, %v1069
    %v1251 = vsel %vm1245, 1.0, %v1070
    %v1252 = vsel %vm1245, 1.0, %v1071
    %v1253 = vsel %vm1245, 1.0, %v1072
    %vm1254 = vcmask 1041408
    %v1255 = vsel %vm1254, %v1246, %v1177
    %v1256 = vsel %vm1254, %v1247, %v1178
    %v1257 = vsel %vm1254, %v1248, %v1179
    %v1258 = vsel %vm1254, %v1249, %v1180
    %v1259 = vsel %vm1254, %v1250, %v1181
    %v1260 = vsel %vm1254, %v1251, %v1182
    %v1261 = vsel %vm1254, %v1252, %v1183
    %v1262 = vsel %vm1254, %v1253, %v1184
    %vm1263 = vcmask 1042432
    %v1264 = vsel %vm1263, %v1255, %v1185
    %v1265 = vsel %vm1263, %v1256, %v1186
    %v1266 = vsel %vm1263, %v1257, %v1187
    %v1267 = vsel %vm1263, %v1258, %v1188
    %v1268 = vsel %vm1263, %v1259, %v1189
    %v1269 = vsel %vm1263, %v1260, %v1190
    %v1270 = vsel %vm1263, %v1261, %v1191
    %v1271 = vsel %vm1263, %v1262, %v1192
    %vm1272 = vcmask 1043456
    %v1273 = vsel %vm1272, %v1264, %v1113
    %v1274 = vsel %vm1272, %v1265, %v1122
    %v1275 = vsel %vm1272, %v1266, %v1131
    %v1276 = vsel %vm1272, %v1267, %v1140
    %v1277 = vsel %vm1272, %v1268, %v1149
    %v1278 = vsel %vm1272, %v1269, %v1158
    %v1279 = vsel %vm1272, %v1270, %v1167
    %v1280 = vsel %vm1272, %v1271, %v1176
    %vm1281 = vcmask 1044480
    %v1282 = vsel %vm1281, %v1273, %v1237
    %v1283 = vsel %vm1281, %v1274, %v1238
    %v1284 = vsel %vm1281, %v1275, %v1239
    %v1285 = vsel %vm1281, %v1276, %v1240
    %v1286 = vsel %vm1281, %v1277, %v1241
    %v1287 = vsel %vm1281, %v1278, %v1242
    %v1288 = vsel %vm1281, %v1279, %v1243
    %v1289 = vsel %vm1281, %v1280, %v1244
    %1290 = vst [vmem:[#allocation5] sm:$0x3f] %v1282
    %1291 = vst [vmem:[#allocation5 + $0x8] sm:$0x3f] %v1283
    %1292 = vst [vmem:[#allocation5 + $0x10] sm:$0x3f] %v1284
    %1293 = vst [vmem:[#allocation5 + $0x18] sm:$0x3f] %v1285
    %1294 = vst [vmem:[#allocation5 + $0x20] sm:$0x3f] %v1286
    %1295 = vst [vmem:[#allocation5 + $0x28] sm:$0x3f] %v1287
    %1296 = vst [vmem:[#allocation5 + $0x30] sm:$0x3f] %v1288
    %1297 = vst [vmem:[#allocation5 + $0x38] sm:$0x3f] %v1289
    // Predicated region
    $region34: #{tpu_custom_call.1} parent=1 // pred_check
      _
    $region35: #{tpu_custom_call.1} parent=1 // pred_check_branch
      %1299 = sbr.rel (0) target = $region37
    $region36: #{tpu_custom_call.1} parent=1 // pred_region
      %1301 = vsyncadd [#allocation3], 0
      %s1303 = sshll.u32 [#allocation5], 4
      %s1304 = int_to_ptr.vmem [resolvable:$true] %s1303
      %s1305 = sshll.u32 %s7, 4
      %s1306 = int_to_ptr.hbm [resolvable:$true] %s1305
      %1308 = dma.vmem_to_hbm [thread:$0]  %s1304, 1024, %s1306, [#allocation3]
    $region37: #{tpu_custom_call.1} parent=1 // pred_fallthru
      _
    // Predicated region
    $region38: #{tpu_custom_call.1} parent=1 // pred_check
      _
    $region39: #{tpu_custom_call.1} parent=1 // pred_check_branch
      %1310 = sbr.rel (0) target = $region41
    $region40: #{tpu_custom_call.1} parent=1 // pred_region
      %1312 = dma.done [#allocation3], 1024
    $region41: #{tpu_custom_call.1} parent=1 // pred_fallthru
      _
    %1313 = vsyncpa [#allocation3], 1
    %1314 = vsyncpa [#allocation4], 1

// kernel: tpu_custom_call.1
$region0: #{tpu_custom_call.1}
  #allocation0 [shape = 'u32[]', space=smem, size = 0x4, offset = 0x4, fixed_abs, tag = 'smem constant byte address 0x4 - core index']
  #allocation1 [shape = 'u32[72,128]{1,0:T(1,128)}', space=vmem, size = 0x9000, scoped, tag = 'internal scratch']
  %s0 = inlined_call_operand.vmem [shape: f32[5], index: 0, kind: input, shape index: {}]
  %s1 = inlined_call_operand.vmem [shape: f32[1,1024], index: 1, kind: input, shape index: {}]
  %s2 = inlined_call_operand.vmem [shape: f32[32,1], index: 2, kind: input, shape index: {}]
  %s3 = inlined_call_operand.vmem [shape: f32[32,1], index: 3, kind: input, shape index: {}]
  %s4 = inlined_call_operand.vmem [shape: f32[32,32], index: 4, kind: input, shape index: {}]
  %s5 = inlined_call_operand.vmem [shape: f32[32,1], index: 5, kind: input, shape index: {}]
  %s6 = inlined_call_operand.vmem [shape: f32[32,1], index: 6, kind: input, shape index: {}]
  %s7 = inlined_call_operand.hbm [shape: f32[6,1024], index: 7, kind: output, shape index: {}]
  %s8 = sld [smem:[#allocation0]]
  $region42: #{tpu_custom_call.1} parent=0
    _
  %s10 = ssub.s32 1, %s8
  %s11 = scalar_select 0, %s10, %s8
  $region1: #{tpu_custom_call.1} parent=0
    #allocation2 [shape = 'u8[512]{0}', space=smem, size = 0x200, scoped, tag = 'input window, operand 0, single buffered']
    #allocation3 [shape = 's32[1]{0}', space=sflag, size = 0x4, scoped, tag = 'scoped memory for tpu_custom_call.1']
    #allocation4 [shape = 's32[1]{0}', space=sflag, size = 0x4, scoped, tag = 'scoped memory for tpu_custom_call.1']
    #allocation5 [shape = 'u8[32768]{0}', space=vmem, size = 0x8000, scoped, tag = 'output window, operand 0, single buffered']
    %12 = vsyncpa [#allocation4], 0
    %13 = vsyncpa [#allocation3], 0
    // Predicated region
    $region2: #{tpu_custom_call.1} parent=1 // pred_check
      _
    $region3: #{tpu_custom_call.1} parent=1 // pred_check_branch
      %15 = sbr.rel (0) target = $region5
    $region4: #{tpu_custom_call.1} parent=1 // pred_region
      %17 = vsyncadd [#allocation4], 0
      %s19 = sshll.u32 %s0, 4
      %s20 = int_to_ptr.vmem [resolvable:$true] %s19
      %22 = dma.vmem_to_smem %s20, 16, [#allocation2], [#allocation4]
    $region5: #{tpu_custom_call.1} parent=1 // pred_fallthru
      _
    // Predicated region
    $region6: #{tpu_custom_call.1} parent=1 // pred_check
      _
    $region7: #{tpu_custom_call.1} parent=1 // pred_check_branch
      %24 = sbr.rel (0) target = $region9
    $region8: #{tpu_custom_call.1} parent=1 // pred_region
      _
    $region9: #{tpu_custom_call.1} parent=1 // pred_fallthru
      _
    // Predicated region
    $region10: #{tpu_custom_call.1} parent=1 // pred_check
      _
    $region11: #{tpu_custom_call.1} parent=1 // pred_check_branch
      %26 = sbr.rel (0) target = $region13
    $region12: #{tpu_custom_call.1} parent=1 // pred_region
      _
    $region13: #{tpu_custom_call.1} parent=1 // pred_fallthru
      _
    // Predicated region
    $region14: #{tpu_custom_call.1} parent=1 // pred_check
      _
    $region15: #{tpu_custom_call.1} parent=1 // pred_check_branch
      %28 = sbr.rel (0) target = $region17
    $region16: #{tpu_custom_call.1} parent=1 // pred_region
      _
    $region17: #{tpu_custom_call.1} parent=1 // pred_fallthru
      _
    // Predicated region
    $region18: #{tpu_custom_call.1} parent=1 // pred_check
      _
    $region19: #{tpu_custom_call.1} parent=1 // pred_check_branch
      %30 = sbr.rel (0) target = $region21
    $region20: #{tpu_custom_call.1} parent=1 // pred_region
      _
    $region21: #{tpu_custom_call.1} parent=1 // pred_fallthru
      _
    // Predicated region
    $region22: #{tpu_custom_call.1} parent=1 // pred_check
      _
    $region23: #{tpu_custom_call.1} parent=1 // pred_check_branch
      %32 = sbr.rel (0) target = $region25
    $region24: #{tpu_custom_call.1} parent=1 // pred_region
      _
    $region25: #{tpu_custom_call.1} parent=1 // pred_fallthru
      _
    // Predicated region
    $region26: #{tpu_custom_call.1} parent=1 // pred_check
      _
    $region27: #{tpu_custom_call.1} parent=1 // pred_check_branch
      %34 = sbr.rel (0) target = $region29
    $region28: #{tpu_custom_call.1} parent=1 // pred_region
      _
    $region29: #{tpu_custom_call.1} parent=1 // pred_fallthru
      _
    // Predicated region
    $region30: #{tpu_custom_call.1} parent=1 // pred_check
      _
    $region31: #{tpu_custom_call.1} parent=1 // pred_check_branch
      %36 = sbr.rel (0) target = $region33
    $region32: #{tpu_custom_call.1} parent=1 // pred_region
      %38 = dma.done [#allocation4], 16
    $region33: #{tpu_custom_call.1} parent=1 // pred_fallthru
      _
    %39 = sfence
    %v40 = vld [vmem:[%s1] sm:$0xff]
    %v41 = vld [vmem:[%s2] sm:$0xff]
    %v42 = vld [vmem:[%s2 + $0x8] sm:$0xff]
    %v43 = vld [vmem:[%s2 + $0x10] sm:$0xff]
    %v44 = vld [vmem:[%s2 + $0x18] sm:$0xff]
    %v45 = vld [vmem:[%s3] sm:$0xff]
    %v46 = vld [vmem:[%s3 + $0x8] sm:$0xff]
    %v47 = vld [vmem:[%s3 + $0x10] sm:$0xff]
    %v48 = vld [vmem:[%s3 + $0x18] sm:$0xff]
    %v49 = vld [vmem:[%s4] sm:$0xff]
    %v50 = vld [vmem:[%s4 + $0x8] sm:$0xff]
    %v51 = vld [vmem:[%s4 + $0x10] sm:$0xff]
    %v52 = vld [vmem:[%s4 + $0x18] sm:$0xff]
    %v53 = vld [vmem:[%s5] sm:$0xff]
    %v54 = vld [vmem:[%s5 + $0x8] sm:$0xff]
    %v55 = vld [vmem:[%s5 + $0x10] sm:$0xff]
    %v56 = vld [vmem:[%s5 + $0x18] sm:$0xff]
    %v57 = vld [vmem:[%s6] sm:$0xff]
    %v58 = vld [vmem:[%s6 + $0x8] sm:$0xff]
    %v59 = vld [vmem:[%s6 + $0x10] sm:$0xff]
    %v60 = vld [vmem:[%s6 + $0x18] sm:$0xff]
    %s61 = sld [smem:[#allocation2]]
    %s62 = sld [smem:[#allocation2 + $0x1]]
    %s63 = sld [smem:[#allocation2 + $0x2]]
    %s64 = sld [smem:[#allocation2 + $0x3]]
    %s65 = sld [smem:[#allocation2 + $0x4]]
    %67 = vset.pattern.permute.xlu0 0
    %68 = vperm.xlu0 %67, %v41
    %v69 = vpop.permute.xlu0 %68
    %72 = vset.pattern.permute.xlu0 0
    %73 = vperm.xlu0 %72, %v42
    %v74 = vpop.permute.xlu0 %73
    %77 = vset.pattern.permute.xlu0 0
    %78 = vperm.xlu0 %77, %v43
    %v79 = vpop.permute.xlu0 %78
    %82 = vset.pattern.permute.xlu0 0
    %83 = vperm.xlu0 %82, %v44
    %v84 = vpop.permute.xlu0 %83
    %v87 = vperm.slane %v40, 0
    %v88 = vperm.slane %v40, 1
    %v89 = vperm.slane %v40, 2
    %v90 = vperm.slane %v40, 3
    %v91 = vperm.slane %v40, 4
    %v92 = vperm.slane %v40, 5
    %v93 = vperm.slane %v40, 6
    %v94 = vperm.slane %v40, 7
    %v103 = vmul.f32 %v69, %v87
    %v104 = vmul.f32 %v69, %v88
    %v105 = vmul.f32 %v69, %v89
    %v106 = vmul.f32 %v69, %v90
    %v107 = vmul.f32 %v69, %v91
    %v108 = vmul.f32 %v69, %v92
    %v109 = vmul.f32 %v69, %v93
    %v110 = vmul.f32 %v69, %v94
    %v111 = vmul.f32 %v74, %v87
    %v112 = vmul.f32 %v74, %v88
    %v113 = vmul.f32 %v74, %v89
    %v114 = vmul.f32 %v74, %v90
    %v115 = vmul.f32 %v74, %v91
    %v116 = vmul.f32 %v74, %v92
    %v117 = vmul.f32 %v74, %v93
    %v118 = vmul.f32 %v74, %v94
    %v119 = vmul.f32 %v79, %v87
    %v120 = vmul.f32 %v79, %v88
    %v121 = vmul.f32 %v79, %v89
    %v122 = vmul.f32 %v79, %v90
    %v123 = vmul.f32 %v79, %v91
    %v124 = vmul.f32 %v79, %v92
    %v125 = vmul.f32 %v79, %v93
    %v126 = vmul.f32 %v79, %v94
    %v127 = vmul.f32 %v84, %v87
    %v128 = vmul.f32 %v84, %v88
    %v129 = vmul.f32 %v84, %v89
    %v130 = vmul.f32 %v84, %v90
    %v131 = vmul.f32 %v84, %v91
    %v132 = vmul.f32 %v84, %v92
    %v133 = vmul.f32 %v84, %v93
    %v134 = vmul.f32 %v84, %v94
    %136 = vset.pattern.permute.xlu0 0
    %137 = vperm.xlu0 %136, %v45
    %v138 = vpop.permute.xlu0 %137
    %141 = vset.pattern.permute.xlu0 0
    %142 = vperm.xlu0 %141, %v46
    %v143 = vpop.permute.xlu0 %142
    %146 = vset.pattern.permute.xlu0 0
    %147 = vperm.xlu0 %146, %v47
    %v148 = vpop.permute.xlu0 %147
    %151 = vset.pattern.permute.xlu0 0
    %152 = vperm.xlu0 %151, %v48
    %v153 = vpop.permute.xlu0 %152
    %v155 = vadd.f32 %v103, %v138
    %v156 = vadd.f32 %v104, %v138
    %v157 = vadd.f32 %v105, %v138
    %v158 = vadd.f32 %v106, %v138
    %v159 = vadd.f32 %v107, %v138
    %v160 = vadd.f32 %v108, %v138
    %v161 = vadd.f32 %v109, %v138
    %v162 = vadd.f32 %v110, %v138
    %v163 = vadd.f32 %v111, %v143
    %v164 = vadd.f32 %v112, %v143
    %v165 = vadd.f32 %v113, %v143
    %v166 = vadd.f32 %v114, %v143
    %v167 = vadd.f32 %v115, %v143
    %v168 = vadd.f32 %v116, %v143
    %v169 = vadd.f32 %v117, %v143
    %v170 = vadd.f32 %v118, %v143
    %v171 = vadd.f32 %v119, %v148
    %v172 = vadd.f32 %v120, %v148
    %v173 = vadd.f32 %v121, %v148
    %v174 = vadd.f32 %v122, %v148
    %v175 = vadd.f32 %v123, %v148
    %v176 = vadd.f32 %v124, %v148
    %v177 = vadd.f32 %v125, %v148
    %v178 = vadd.f32 %v126, %v148
    %v179 = vadd.f32 %v127, %v153
    %v180 = vadd.f32 %v128, %v153
    %v181 = vadd.f32 %v129, %v153
    %v182 = vadd.f32 %v130, %v153
    %v183 = vadd.f32 %v131, %v153
    %v184 = vadd.f32 %v132, %v153
    %v185 = vadd.f32 %v133, %v153
    %v186 = vadd.f32 %v134, %v153
    %v187 = vtanh.pop %v155
    %v188 = vtanh.pop %v156
    %v189 = vtanh.pop %v157
    %v190 = vtanh.pop %v158
    %v191 = vtanh.pop %v159
    %v192 = vtanh.pop %v160
    %v193 = vtanh.pop %v161
    %v194 = vtanh.pop %v162
    %v195 = vtanh.pop %v163
    %v196 = vtanh.pop %v164
    %v197 = vtanh.pop %v165
    %v198 = vtanh.pop %v166
    %v199 = vtanh.pop %v167
    %v200 = vtanh.pop %v168
    %v201 = vtanh.pop %v169
    %v202 = vtanh.pop %v170
    %v203 = vtanh.pop %v171
    %v204 = vtanh.pop %v172
    %v205 = vtanh.pop %v173
    %v206 = vtanh.pop %v174
    %v207 = vtanh.pop %v175
    %v208 = vtanh.pop %v176
    %v209 = vtanh.pop %v177
    %v210 = vtanh.pop %v178
    %v211 = vtanh.pop %v179
    %v212 = vtanh.pop %v180
    %v213 = vtanh.pop %v181
    %v214 = vtanh.pop %v182
    %v215 = vtanh.pop %v183
    %v216 = vtanh.pop %v184
    %v217 = vtanh.pop %v185
    %v218 = vtanh.pop %v186
    %v219 = vmul.f32 %v187, %v187
    %v220 = vmul.f32 %v188, %v188
    %v221 = vmul.f32 %v189, %v189
    %v222 = vmul.f32 %v190, %v190
    %v223 = vmul.f32 %v191, %v191
    %v224 = vmul.f32 %v192, %v192
    %v225 = vmul.f32 %v193, %v193
    %v226 = vmul.f32 %v194, %v194
    %v227 = vmul.f32 %v195, %v195
    %v228 = vmul.f32 %v196, %v196
    %v229 = vmul.f32 %v197, %v197
    %v230 = vmul.f32 %v198, %v198
    %v231 = vmul.f32 %v199, %v199
    %v232 = vmul.f32 %v200, %v200
    %v233 = vmul.f32 %v201, %v201
    %v234 = vmul.f32 %v202, %v202
    %v235 = vmul.f32 %v203, %v203
    %v236 = vmul.f32 %v204, %v204
    %v237 = vmul.f32 %v205, %v205
    %v238 = vmul.f32 %v206, %v206
    %v239 = vmul.f32 %v207, %v207
    %v240 = vmul.f32 %v208, %v208
    %v241 = vmul.f32 %v209, %v209
    %v242 = vmul.f32 %v210, %v210
    %v243 = vmul.f32 %v211, %v211
    %v244 = vmul.f32 %v212, %v212
    %v245 = vmul.f32 %v213, %v213
    %v246 = vmul.f32 %v214, %v214
    %v247 = vmul.f32 %v215, %v215
    %v248 = vmul.f32 %v216, %v216
    %v249 = vmul.f32 %v217, %v217
    %v250 = vmul.f32 %v218, %v218
    %v251 = vsub.f32 1.0, %v219
    %v252 = vsub.f32 1.0, %v220
    %v253 = vsub.f32 1.0, %v221
    %v254 = vsub.f32 1.0, %v222
    %v255 = vsub.f32 1.0, %v223
    %v256 = vsub.f32 1.0, %v224
    %v257 = vsub.f32 1.0, %v225
    %v258 = vsub.f32 1.0, %v226
    %v259 = vsub.f32 1.0, %v227
    %v260 = vsub.f32 1.0, %v228
    %v261 = vsub.f32 1.0, %v229
    %v262 = vsub.f32 1.0, %v230
    %v263 = vsub.f32 1.0, %v231
    %v264 = vsub.f32 1.0, %v232
    %v265 = vsub.f32 1.0, %v233
    %v266 = vsub.f32 1.0, %v234
    %v267 = vsub.f32 1.0, %v235
    %v268 = vsub.f32 1.0, %v236
    %v269 = vsub.f32 1.0, %v237
    %v270 = vsub.f32 1.0, %v238
    %v271 = vsub.f32 1.0, %v239
    %v272 = vsub.f32 1.0, %v240
    %v273 = vsub.f32 1.0, %v241
    %v274 = vsub.f32 1.0, %v242
    %v275 = vsub.f32 1.0, %v243
    %v276 = vsub.f32 1.0, %v244
    %v277 = vsub.f32 1.0, %v245
    %v278 = vsub.f32 1.0, %v246
    %v279 = vsub.f32 1.0, %v247
    %v280 = vsub.f32 1.0, %v248
    %v281 = vsub.f32 1.0, %v249
    %v282 = vsub.f32 1.0, %v250
    %v283 = vmul.f32 %v251, %v69
    %v284 = vmul.f32 %v252, %v69
    %v285 = vmul.f32 %v253, %v69
    %v286 = vmul.f32 %v254, %v69
    %v287 = vmul.f32 %v255, %v69
    %v288 = vmul.f32 %v256, %v69
    %v289 = vmul.f32 %v257, %v69
    %v290 = vmul.f32 %v258, %v69
    %v291 = vmul.f32 %v259, %v74
    %v292 = vmul.f32 %v260, %v74
    %v293 = vmul.f32 %v261, %v74
    %v294 = vmul.f32 %v262, %v74
    %v295 = vmul.f32 %v263, %v74
    %v296 = vmul.f32 %v264, %v74
    %v297 = vmul.f32 %v265, %v74
    %v298 = vmul.f32 %v266, %v74
    %v299 = vmul.f32 %v267, %v79
    %v300 = vmul.f32 %v268, %v79
    %v301 = vmul.f32 %v269, %v79
    %v302 = vmul.f32 %v270, %v79
    %v303 = vmul.f32 %v271, %v79
    %v304 = vmul.f32 %v272, %v79
    %v305 = vmul.f32 %v273, %v79
    %v306 = vmul.f32 %v274, %v79
    %v307 = vmul.f32 %v275, %v84
    %v308 = vmul.f32 %v276, %v84
    %v309 = vmul.f32 %v277, %v84
    %v310 = vmul.f32 %v278, %v84
    %v311 = vmul.f32 %v279, %v84
    %v312 = vmul.f32 %v280, %v84
    %v313 = vmul.f32 %v281, %v84
    %v314 = vmul.f32 %v282, %v84
    %vm315 = vcmask 261120
    %v317 = vsel %vm315, %v49, 0
    %v320 = vsel %vm315, %v50, 0
    %v323 = vsel %vm315, %v51, 0
    %v326 = vsel %vm315, %v52, 0
    %328 = vmatpush.msra.mxu0 0.0
    %329 = vmatpush.msra.mxu0 0.0
    %330 = vmatpush.msra.mxu0 0.0
    %331 = vmatpush.msra.mxu0 0.0
    %332 = vmatpush.msra.mxu0 0.0
    %333 = vmatpush.msra.mxu0 0.0
    %334 = vmatpush.msra.mxu0 0.0
    %335 = vmatpush.msra.mxu0 0.0
    %336 = vmatpush.msra.mxu0 0.0
    %337 = vmatpush.msra.mxu0 0.0
    %338 = vmatpush.msra.mxu0 0.0
    %339 = vmatpush.msra.mxu0 0.0
    %340 = vmatpush.msra.mxu0 %v307
    %341 = vmatpush.msra.mxu0 %v299
    %342 = vmatpush.msra.mxu0 %v291
    %343 = vmatpush.msra.mxu0 %v283
    %344 = vmatmul.f32.gmra.mxu0 %v317
    %v345 = vpop.f32.mrf.mxu0
    %v346 = vadd.f32 0.0, %v345
    %347 = vmatmul.f32.gmra.mxu0 %v320
    %v348 = vpop.f32.mrf.mxu0
    %v349 = vadd.f32 0.0, %v348
    %350 = vmatmul.f32.gmra.mxu0 %v323
    %v351 = vpop.f32.mrf.mxu0
    %v352 = vadd.f32 0.0, %v351
    %353 = vmatmul.f32.gmra.mxu0 %v326
    %v354 = vpop.f32.mrf.mxu0
    %v355 = vadd.f32 0.0, %v354
    %356 = vdwg.mxu0
    %357 = vmatpush.msra.mxu0 0.0
    %358 = vmatpush.msra.mxu0 0.0
    %359 = vmatpush.msra.mxu0 0.0
    %360 = vmatpush.msra.mxu0 0.0
    %361 = vmatpush.msra.mxu0 0.0
    %362 = vmatpush.msra.mxu0 0.0
    %363 = vmatpush.msra.mxu0 0.0
    %364 = vmatpush.msra.mxu0 0.0
    %365 = vmatpush.msra.mxu0 0.0
    %366 = vmatpush.msra.mxu0 0.0
    %367 = vmatpush.msra.mxu0 0.0
    %368 = vmatpush.msra.mxu0 0.0
    %369 = vmatpush.msra.mxu0 %v308
    %370 = vmatpush.msra.mxu0 %v300
    %371 = vmatpush.msra.mxu0 %v292
    %372 = vmatpush.msra.mxu0 %v284
    %373 = vmatmul.f32.gmra.mxu0 %v317
    %v374 = vpop.f32.mrf.mxu0
    %v375 = vadd.f32 0.0, %v374
    %376 = vmatmul.f32.gmra.mxu0 %v320
    %v377 = vpop.f32.mrf.mxu0
    %v378 = vadd.f32 0.0, %v377
    %379 = vmatmul.f32.gmra.mxu0 %v323
    %v380 = vpop.f32.mrf.mxu0
    %v381 = vadd.f32 0.0, %v380
    %382 = vmatmul.f32.gmra.mxu0 %v326
    %v383 = vpop.f32.mrf.mxu0
    %v384 = vadd.f32 0.0, %v383
    %385 = vdwg.mxu0
    %386 = vmatpush.msra.mxu0 0.0
    %387 = vmatpush.msra.mxu0 0.0
    %388 = vmatpush.msra.mxu0 0.0
    %389 = vmatpush.msra.mxu0 0.0
    %390 = vmatpush.msra.mxu0 0.0
    %391 = vmatpush.msra.mxu0 0.0
    %392 = vmatpush.msra.mxu0 0.0
    %393 = vmatpush.msra.mxu0 0.0
    %394 = vmatpush.msra.mxu0 0.0
    %395 = vmatpush.msra.mxu0 0.0
    %396 = vmatpush.msra.mxu0 0.0
    %397 = vmatpush.msra.mxu0 0.0
    %398 = vmatpush.msra.mxu0 %v309
    %399 = vmatpush.msra.mxu0 %v301
    %400 = vmatpush.msra.mxu0 %v293
    %401 = vmatpush.msra.mxu0 %v285
    %402 = vmatmul.f32.gmra.mxu0 %v317
    %v403 = vpop.f32.mrf.mxu0
    %v404 = vadd.f32 0.0, %v403
    %405 = vmatmul.f32.gmra.mxu0 %v320
    %v406 = vpop.f32.mrf.mxu0
    %v407 = vadd.f32 0.0, %v406
    %408 = vmatmul.f32.gmra.mxu0 %v323
    %v409 = vpop.f32.mrf.mxu0
    %v410 = vadd.f32 0.0, %v409
    %411 = vmatmul.f32.gmra.mxu0 %v326
    %v412 = vpop.f32.mrf.mxu0
    %v413 = vadd.f32 0.0, %v412
    %414 = vdwg.mxu0
    %415 = vmatpush.msra.mxu0 0.0
    %416 = vmatpush.msra.mxu0 0.0
    %417 = vmatpush.msra.mxu0 0.0
    %418 = vmatpush.msra.mxu0 0.0
    %419 = vmatpush.msra.mxu0 0.0
    %420 = vmatpush.msra.mxu0 0.0
    %421 = vmatpush.msra.mxu0 0.0
    %422 = vmatpush.msra.mxu0 0.0
    %423 = vmatpush.msra.mxu0 0.0
    %424 = vmatpush.msra.mxu0 0.0
    %425 = vmatpush.msra.mxu0 0.0
    %426 = vmatpush.msra.mxu0 0.0
    %427 = vmatpush.msra.mxu0 %v310
    %428 = vmatpush.msra.mxu0 %v302
    %429 = vmatpush.msra.mxu0 %v294
    %430 = vmatpush.msra.mxu0 %v286
    %431 = vmatmul.f32.gmra.mxu0 %v317
    %v432 = vpop.f32.mrf.mxu0
    %v433 = vadd.f32 0.0, %v432
    %434 = vmatmul.f32.gmra.mxu0 %v320
    %v435 = vpop.f32.mrf.mxu0
    %v436 = vadd.f32 0.0, %v435
    %437 = vmatmul.f32.gmra.mxu0 %v323
    %v438 = vpop.f32.mrf.mxu0
    %v439 = vadd.f32 0.0, %v438
    %440 = vmatmul.f32.gmra.mxu0 %v326
    %v441 = vpop.f32.mrf.mxu0
    %v442 = vadd.f32 0.0, %v441
    %443 = vdwg.mxu0
    %444 = vmatpush.msra.mxu0 0.0
    %445 = vmatpush.msra.mxu0 0.0
    %446 = vmatpush.msra.mxu0 0.0
    %447 = vmatpush.msra.mxu0 0.0
    %448 = vmatpush.msra.mxu0 0.0
    %449 = vmatpush.msra.mxu0 0.0
    %450 = vmatpush.msra.mxu0 0.0
    %451 = vmatpush.msra.mxu0 0.0
    %452 = vmatpush.msra.mxu0 0.0
    %453 = vmatpush.msra.mxu0 0.0
    %454 = vmatpush.msra.mxu0 0.0
    %455 = vmatpush.msra.mxu0 0.0
    %456 = vmatpush.msra.mxu0 %v311
    %457 = vmatpush.msra.mxu0 %v303
    %458 = vmatpush.msra.mxu0 %v295
    %459 = vmatpush.msra.mxu0 %v287
    %460 = vmatmul.f32.gmra.mxu0 %v317
    %v461 = vpop.f32.mrf.mxu0
    %v462 = vadd.f32 0.0, %v461
    %463 = vmatmul.f32.gmra.mxu0 %v320
    %v464 = vpop.f32.mrf.mxu0
    %v465 = vadd.f32 0.0, %v464
    %466 = vmatmul.f32.gmra.mxu0 %v323
    %v467 = vpop.f32.mrf.mxu0
    %v468 = vadd.f32 0.0, %v467
    %469 = vmatmul.f32.gmra.mxu0 %v326
    %v470 = vpop.f32.mrf.mxu0
    %v471 = vadd.f32 0.0, %v470
    %472 = vdwg.mxu0
    %473 = vmatpush.msra.mxu0 0.0
    %474 = vmatpush.msra.mxu0 0.0
    %475 = vmatpush.msra.mxu0 0.0
    %476 = vmatpush.msra.mxu0 0.0
    %477 = vmatpush.msra.mxu0 0.0
    %478 = vmatpush.msra.mxu0 0.0
    %479 = vmatpush.msra.mxu0 0.0
    %480 = vmatpush.msra.mxu0 0.0
    %481 = vmatpush.msra.mxu0 0.0
    %482 = vmatpush.msra.mxu0 0.0
    %483 = vmatpush.msra.mxu0 0.0
    %484 = vmatpush.msra.mxu0 0.0
    %485 = vmatpush.msra.mxu0 %v312
    %486 = vmatpush.msra.mxu0 %v304
    %487 = vmatpush.msra.mxu0 %v296
    %488 = vmatpush.msra.mxu0 %v288
    %489 = vmatmul.f32.gmra.mxu0 %v317
    %v490 = vpop.f32.mrf.mxu0
    %v491 = vadd.f32 0.0, %v490
    %492 = vmatmul.f32.gmra.mxu0 %v320
    %v493 = vpop.f32.mrf.mxu0
    %v494 = vadd.f32 0.0, %v493
    %495 = vmatmul.f32.gmra.mxu0 %v323
    %v496 = vpop.f32.mrf.mxu0
    %v497 = vadd.f32 0.0, %v496
    %498 = vmatmul.f32.gmra.mxu0 %v326
    %v499 = vpop.f32.mrf.mxu0
    %v500 = vadd.f32 0.0, %v499
    %501 = vdwg.mxu0
    %502 = vmatpush.msra.mxu0 0.0
    %503 = vmatpush.msra.mxu0 0.0
    %504 = vmatpush.msra.mxu0 0.0
    %505 = vmatpush.msra.mxu0 0.0
    %506 = vmatpush.msra.mxu0 0.0
    %507 = vmatpush.msra.mxu0 0.0
    %508 = vmatpush.msra.mxu0 0.0
    %509 = vmatpush.msra.mxu0 0.0
    %510 = vmatpush.msra.mxu0 0.0
    %511 = vmatpush.msra.mxu0 0.0
    %512 = vmatpush.msra.mxu0 0.0
    %513 = vmatpush.msra.mxu0 0.0
    %514 = vmatpush.msra.mxu0 %v313
    %515 = vmatpush.msra.mxu0 %v305
    %516 = vmatpush.msra.mxu0 %v297
    %517 = vmatpush.msra.mxu0 %v289
    %518 = vmatmul.f32.gmra.mxu0 %v317
    %v519 = vpop.f32.mrf.mxu0
    %v520 = vadd.f32 0.0, %v519
    %521 = vmatmul.f32.gmra.mxu0 %v320
    %v522 = vpop.f32.mrf.mxu0
    %v523 = vadd.f32 0.0, %v522
    %524 = vmatmul.f32.gmra.mxu0 %v323
    %v525 = vpop.f32.mrf.mxu0
    %v526 = vadd.f32 0.0, %v525
    %527 = vmatmul.f32.gmra.mxu0 %v326
    %v528 = vpop.f32.mrf.mxu0
    %v529 = vadd.f32 0.0, %v528
    %530 = vdwg.mxu0
    %531 = vmatpush.msra.mxu0 0.0
    %532 = vmatpush.msra.mxu0 0.0
    %533 = vmatpush.msra.mxu0 0.0
    %534 = vmatpush.msra.mxu0 0.0
    %535 = vmatpush.msra.mxu0 0.0
    %536 = vmatpush.msra.mxu0 0.0
    %537 = vmatpush.msra.mxu0 0.0
    %538 = vmatpush.msra.mxu0 0.0
    %539 = vmatpush.msra.mxu0 0.0
    %540 = vmatpush.msra.mxu0 0.0
    %541 = vmatpush.msra.mxu0 0.0
    %542 = vmatpush.msra.mxu0 0.0
    %543 = vmatpush.msra.mxu0 %v314
    %544 = vmatpush.msra.mxu0 %v306
    %545 = vmatpush.msra.mxu0 %v298
    %546 = vmatpush.msra.mxu0 %v290
    %547 = vmatmul.f32.gmra.mxu0 %v317
    %v548 = vpop.f32.mrf.mxu0
    %v549 = vadd.f32 0.0, %v548
    %550 = vmatmul.f32.gmra.mxu0 %v320
    %v551 = vpop.f32.mrf.mxu0
    %v552 = vadd.f32 0.0, %v551
    %553 = vmatmul.f32.gmra.mxu0 %v323
    %v554 = vpop.f32.mrf.mxu0
    %v555 = vadd.f32 0.0, %v554
    %556 = vmatmul.f32.gmra.mxu0 %v326
    %v557 = vpop.f32.mrf.mxu0
    %v558 = vadd.f32 0.0, %v557
    %559 = vdwg.mxu0
    %561 = vset.pattern.permute.xlu0 0
    %562 = vperm.xlu0 %561, %v53
    %v563 = vpop.permute.xlu0 %562
    %566 = vset.pattern.permute.xlu0 0
    %567 = vperm.xlu0 %566, %v54
    %v568 = vpop.permute.xlu0 %567
    %571 = vset.pattern.permute.xlu0 0
    %572 = vperm.xlu0 %571, %v55
    %v573 = vpop.permute.xlu0 %572
    %576 = vset.pattern.permute.xlu0 0
    %577 = vperm.xlu0 %576, %v56
    %v578 = vpop.permute.xlu0 %577
    %580 = vmatpush.msra.mxu0 0.0
    %581 = vmatpush.msra.mxu0 0.0
    %582 = vmatpush.msra.mxu0 0.0
    %583 = vmatpush.msra.mxu0 0.0
    %584 = vmatpush.msra.mxu0 0.0
    %585 = vmatpush.msra.mxu0 0.0
    %586 = vmatpush.msra.mxu0 0.0
    %587 = vmatpush.msra.mxu0 0.0
    %588 = vmatpush.msra.mxu0 0.0
    %589 = vmatpush.msra.mxu0 0.0
    %590 = vmatpush.msra.mxu0 0.0
    %591 = vmatpush.msra.mxu0 0.0
    %592 = vmatpush.msra.mxu0 %v211
    %593 = vmatpush.msra.mxu0 %v203
    %594 = vmatpush.msra.mxu0 %v195
    %595 = vmatpush.msra.mxu0 %v187
    %596 = vmatmul.f32.gmra.mxu0 %v317
    %v597 = vpop.f32.mrf.mxu0
    %v598 = vadd.f32 %v563, %v597
    %599 = vmatmul.f32.gmra.mxu0 %v320
    %v600 = vpop.f32.mrf.mxu0
    %v601 = vadd.f32 %v568, %v600
    %602 = vmatmul.f32.gmra.mxu0 %v323
    %v603 = vpop.f32.mrf.mxu0
    %v604 = vadd.f32 %v573, %v603
    %605 = vmatmul.f32.gmra.mxu0 %v326
    %v606 = vpop.f32.mrf.mxu0
    %v607 = vadd.f32 %v578, %v606
    %608 = vdwg.mxu0
    %609 = vmatpush.msra.mxu0 0.0
    %610 = vmatpush.msra.mxu0 0.0
    %611 = vmatpush.msra.mxu0 0.0
    %612 = vmatpush.msra.mxu0 0.0
    %613 = vmatpush.msra.mxu0 0.0
    %614 = vmatpush.msra.mxu0 0.0
    %615 = vmatpush.msra.mxu0 0.0
    %616 = vmatpush.msra.mxu0 0.0
    %617 = vmatpush.msra.mxu0 0.0
    %618 = vmatpush.msra.mxu0 0.0
    %619 = vmatpush.msra.mxu0 0.0
    %620 = vmatpush.msra.mxu0 0.0
    %621 = vmatpush.msra.mxu0 %v212
    %622 = vmatpush.msra.mxu0 %v204
    %623 = vmatpush.msra.mxu0 %v196
    %624 = vmatpush.msra.mxu0 %v188
    %625 = vmatmul.f32.gmra.mxu0 %v317
    %v626 = vpop.f32.mrf.mxu0
    %v627 = vadd.f32 %v563, %v626
    %628 = vmatmul.f32.gmra.mxu0 %v320
    %v629 = vpop.f32.mrf.mxu0
    %v630 = vadd.f32 %v568, %v629
    %631 = vmatmul.f32.gmra.mxu0 %v323
    %v632 = vpop.f32.mrf.mxu0
    %v633 = vadd.f32 %v573, %v632
    %634 = vmatmul.f32.gmra.mxu0 %v326
    %v635 = vpop.f32.mrf.mxu0
    %v636 = vadd.f32 %v578, %v635
    %637 = vdwg.mxu0
    %638 = vmatpush.msra.mxu0 0.0
    %639 = vmatpush.msra.mxu0 0.0
    %640 = vmatpush.msra.mxu0 0.0
    %641 = vmatpush.msra.mxu0 0.0
    %642 = vmatpush.msra.mxu0 0.0
    %643 = vmatpush.msra.mxu0 0.0
    %644 = vmatpush.msra.mxu0 0.0
    %645 = vmatpush.msra.mxu0 0.0
    %646 = vmatpush.msra.mxu0 0.0
    %647 = vmatpush.msra.mxu0 0.0
    %648 = vmatpush.msra.mxu0 0.0
    %649 = vmatpush.msra.mxu0 0.0
    %650 = vmatpush.msra.mxu0 %v213
    %651 = vmatpush.msra.mxu0 %v205
    %652 = vmatpush.msra.mxu0 %v197
    %653 = vmatpush.msra.mxu0 %v189
    %654 = vmatmul.f32.gmra.mxu0 %v317
    %v655 = vpop.f32.mrf.mxu0
    %v656 = vadd.f32 %v563, %v655
    %657 = vmatmul.f32.gmra.mxu0 %v320
    %v658 = vpop.f32.mrf.mxu0
    %v659 = vadd.f32 %v568, %v658
    %660 = vmatmul.f32.gmra.mxu0 %v323
    %v661 = vpop.f32.mrf.mxu0
    %v662 = vadd.f32 %v573, %v661
    %663 = vmatmul.f32.gmra.mxu0 %v326
    %v664 = vpop.f32.mrf.mxu0
    %v665 = vadd.f32 %v578, %v664
    %666 = vdwg.mxu0
    %667 = vmatpush.msra.mxu0 0.0
    %668 = vmatpush.msra.mxu0 0.0
    %669 = vmatpush.msra.mxu0 0.0
    %670 = vmatpush.msra.mxu0 0.0
    %671 = vmatpush.msra.mxu0 0.0
    %672 = vmatpush.msra.mxu0 0.0
    %673 = vmatpush.msra.mxu0 0.0
    %674 = vmatpush.msra.mxu0 0.0
    %675 = vmatpush.msra.mxu0 0.0
    %676 = vmatpush.msra.mxu0 0.0
    %677 = vmatpush.msra.mxu0 0.0
    %678 = vmatpush.msra.mxu0 0.0
    %679 = vmatpush.msra.mxu0 %v214
    %680 = vmatpush.msra.mxu0 %v206
    %681 = vmatpush.msra.mxu0 %v198
    %682 = vmatpush.msra.mxu0 %v190
    %683 = vmatmul.f32.gmra.mxu0 %v317
    %v684 = vpop.f32.mrf.mxu0
    %v685 = vadd.f32 %v563, %v684
    %686 = vmatmul.f32.gmra.mxu0 %v320
    %v687 = vpop.f32.mrf.mxu0
    %v688 = vadd.f32 %v568, %v687
    %689 = vmatmul.f32.gmra.mxu0 %v323
    %v690 = vpop.f32.mrf.mxu0
    %v691 = vadd.f32 %v573, %v690
    %692 = vmatmul.f32.gmra.mxu0 %v326
    %v693 = vpop.f32.mrf.mxu0
    %v694 = vadd.f32 %v578, %v693
    %695 = vdwg.mxu0
    %696 = vmatpush.msra.mxu0 0.0
    %697 = vmatpush.msra.mxu0 0.0
    %698 = vmatpush.msra.mxu0 0.0
    %699 = vmatpush.msra.mxu0 0.0
    %700 = vmatpush.msra.mxu0 0.0
    %701 = vmatpush.msra.mxu0 0.0
    %702 = vmatpush.msra.mxu0 0.0
    %703 = vmatpush.msra.mxu0 0.0
    %704 = vmatpush.msra.mxu0 0.0
    %705 = vmatpush.msra.mxu0 0.0
    %706 = vmatpush.msra.mxu0 0.0
    %707 = vmatpush.msra.mxu0 0.0
    %708 = vmatpush.msra.mxu0 %v215
    %709 = vmatpush.msra.mxu0 %v207
    %710 = vmatpush.msra.mxu0 %v199
    %711 = vmatpush.msra.mxu0 %v191
    %712 = vmatmul.f32.gmra.mxu0 %v317
    %v713 = vpop.f32.mrf.mxu0
    %v714 = vadd.f32 %v563, %v713
    %715 = vmatmul.f32.gmra.mxu0 %v320
    %v716 = vpop.f32.mrf.mxu0
    %v717 = vadd.f32 %v568, %v716
    %718 = vmatmul.f32.gmra.mxu0 %v323
    %v719 = vpop.f32.mrf.mxu0
    %v720 = vadd.f32 %v573, %v719
    %721 = vmatmul.f32.gmra.mxu0 %v326
    %v722 = vpop.f32.mrf.mxu0
    %v723 = vadd.f32 %v578, %v722
    %724 = vdwg.mxu0
    %725 = vmatpush.msra.mxu0 0.0
    %726 = vmatpush.msra.mxu0 0.0
    %727 = vmatpush.msra.mxu0 0.0
    %728 = vmatpush.msra.mxu0 0.0
    %729 = vmatpush.msra.mxu0 0.0
    %730 = vmatpush.msra.mxu0 0.0
    %731 = vmatpush.msra.mxu0 0.0
    %732 = vmatpush.msra.mxu0 0.0
    %733 = vmatpush.msra.mxu0 0.0
    %734 = vmatpush.msra.mxu0 0.0
    %735 = vmatpush.msra.mxu0 0.0
    %736 = vmatpush.msra.mxu0 0.0
    %737 = vmatpush.msra.mxu0 %v216
    %738 = vmatpush.msra.mxu0 %v208
    %739 = vmatpush.msra.mxu0 %v200
    %740 = vmatpush.msra.mxu0 %v192
    %741 = vmatmul.f32.gmra.mxu0 %v317
    %v742 = vpop.f32.mrf.mxu0
    %v743 = vadd.f32 %v563, %v742
    %744 = vmatmul.f32.gmra.mxu0 %v320
    %v745 = vpop.f32.mrf.mxu0
    %v746 = vadd.f32 %v568, %v745
    %747 = vmatmul.f32.gmra.mxu0 %v323
    %v748 = vpop.f32.mrf.mxu0
    %v749 = vadd.f32 %v573, %v748
    %750 = vmatmul.f32.gmra.mxu0 %v326
    %v751 = vpop.f32.mrf.mxu0
    %v752 = vadd.f32 %v578, %v751
    %753 = vdwg.mxu0
    %754 = vmatpush.msra.mxu0 0.0
    %755 = vmatpush.msra.mxu0 0.0
    %756 = vmatpush.msra.mxu0 0.0
    %757 = vmatpush.msra.mxu0 0.0
    %758 = vmatpush.msra.mxu0 0.0
    %759 = vmatpush.msra.mxu0 0.0
    %760 = vmatpush.msra.mxu0 0.0
    %761 = vmatpush.msra.mxu0 0.0
    %762 = vmatpush.msra.mxu0 0.0
    %763 = vmatpush.msra.mxu0 0.0
    %764 = vmatpush.msra.mxu0 0.0
    %765 = vmatpush.msra.mxu0 0.0
    %766 = vmatpush.msra.mxu0 %v217
    %767 = vmatpush.msra.mxu0 %v209
    %768 = vmatpush.msra.mxu0 %v201
    %769 = vmatpush.msra.mxu0 %v193
    %770 = vmatmul.f32.gmra.mxu0 %v317
    %v771 = vpop.f32.mrf.mxu0
    %v772 = vadd.f32 %v563, %v771
    %773 = vmatmul.f32.gmra.mxu0 %v320
    %v774 = vpop.f32.mrf.mxu0
    %v775 = vadd.f32 %v568, %v774
    %776 = vmatmul.f32.gmra.mxu0 %v323
    %v777 = vpop.f32.mrf.mxu0
    %v778 = vadd.f32 %v573, %v777
    %779 = vmatmul.f32.gmra.mxu0 %v326
    %v780 = vpop.f32.mrf.mxu0
    %v781 = vadd.f32 %v578, %v780
    %782 = vdwg.mxu0
    %783 = vmatpush.msra.mxu0 0.0
    %784 = vmatpush.msra.mxu0 0.0
    %785 = vmatpush.msra.mxu0 0.0
    %786 = vmatpush.msra.mxu0 0.0
    %787 = vmatpush.msra.mxu0 0.0
    %788 = vmatpush.msra.mxu0 0.0
    %789 = vmatpush.msra.mxu0 0.0
    %790 = vmatpush.msra.mxu0 0.0
    %791 = vmatpush.msra.mxu0 0.0
    %792 = vmatpush.msra.mxu0 0.0
    %793 = vmatpush.msra.mxu0 0.0
    %794 = vmatpush.msra.mxu0 0.0
    %795 = vmatpush.msra.mxu0 %v218
    %796 = vmatpush.msra.mxu0 %v210
    %797 = vmatpush.msra.mxu0 %v202
    %798 = vmatpush.msra.mxu0 %v194
    %799 = vmatmul.f32.gmra.mxu0 %v317
    %v800 = vpop.f32.mrf.mxu0
    %v801 = vadd.f32 %v563, %v800
    %802 = vmatmul.f32.gmra.mxu0 %v320
    %v803 = vpop.f32.mrf.mxu0
    %v804 = vadd.f32 %v568, %v803
    %805 = vmatmul.f32.gmra.mxu0 %v323
    %v806 = vpop.f32.mrf.mxu0
    %v807 = vadd.f32 %v573, %v806
    %808 = vmatmul.f32.gmra.mxu0 %v326
    %v809 = vpop.f32.mrf.mxu0
    %v810 = vadd.f32 %v578, %v809
    %811 = vdwg.mxu0
    %v812 = vtanh.pop %v598
    %v813 = vtanh.pop %v627
    %v814 = vtanh.pop %v656
    %v815 = vtanh.pop %v685
    %v816 = vtanh.pop %v714
    %v817 = vtanh.pop %v743
    %v818 = vtanh.pop %v772
    %v819 = vtanh.pop %v801
    %v820 = vtanh.pop %v601
    %v821 = vtanh.pop %v630
    %v822 = vtanh.pop %v659
    %v823 = vtanh.pop %v688
    %v824 = vtanh.pop %v717
    %v825 = vtanh.pop %v746
    %v826 = vtanh.pop %v775
    %v827 = vtanh.pop %v804
    %v828 = vtanh.pop %v604
    %v829 = vtanh.pop %v633
    %v830 = vtanh.pop %v662
    %v831 = vtanh.pop %v691
    %v832 = vtanh.pop %v720
    %v833 = vtanh.pop %v749
    %v834 = vtanh.pop %v778
    %v835 = vtanh.pop %v807
    %v836 = vtanh.pop %v607
    %v837 = vtanh.pop %v636
    %v838 = vtanh.pop %v665
    %v839 = vtanh.pop %v694
    %v840 = vtanh.pop %v723
    %v841 = vtanh.pop %v752
    %v842 = vtanh.pop %v781
    %v843 = vtanh.pop %v810
    %v844 = vmul.f32 %v812, %v812
    %v845 = vmul.f32 %v813, %v813
    %v846 = vmul.f32 %v814, %v814
    %v847 = vmul.f32 %v815, %v815
    %v848 = vmul.f32 %v816, %v816
    %v849 = vmul.f32 %v817, %v817
    %v850 = vmul.f32 %v818, %v818
    %v851 = vmul.f32 %v819, %v819
    %v852 = vmul.f32 %v820, %v820
    %v853 = vmul.f32 %v821, %v821
    %v854 = vmul.f32 %v822, %v822
    %v855 = vmul.f32 %v823, %v823
    %v856 = vmul.f32 %v824, %v824
    %v857 = vmul.f32 %v825, %v825
    %v858 = vmul.f32 %v826, %v826
    %v859 = vmul.f32 %v827, %v827
    %v860 = vmul.f32 %v828, %v828
    %v861 = vmul.f32 %v829, %v829
    %v862 = vmul.f32 %v830, %v830
    %v863 = vmul.f32 %v831, %v831
    %v864 = vmul.f32 %v832, %v832
    %v865 = vmul.f32 %v833, %v833
    %v866 = vmul.f32 %v834, %v834
    %v867 = vmul.f32 %v835, %v835
    %v868 = vmul.f32 %v836, %v836
    %v869 = vmul.f32 %v837, %v837
    %v870 = vmul.f32 %v838, %v838
    %v871 = vmul.f32 %v839, %v839
    %v872 = vmul.f32 %v840, %v840
    %v873 = vmul.f32 %v841, %v841
    %v874 = vmul.f32 %v842, %v842
    %v875 = vmul.f32 %v843, %v843
    %v876 = vsub.f32 1.0, %v844
    %v877 = vsub.f32 1.0, %v845
    %v878 = vsub.f32 1.0, %v846
    %v879 = vsub.f32 1.0, %v847
    %v880 = vsub.f32 1.0, %v848
    %v881 = vsub.f32 1.0, %v849
    %v882 = vsub.f32 1.0, %v850
    %v883 = vsub.f32 1.0, %v851
    %v884 = vsub.f32 1.0, %v852
    %v885 = vsub.f32 1.0, %v853
    %v886 = vsub.f32 1.0, %v854
    %v887 = vsub.f32 1.0, %v855
    %v888 = vsub.f32 1.0, %v856
    %v889 = vsub.f32 1.0, %v857
    %v890 = vsub.f32 1.0, %v858
    %v891 = vsub.f32 1.0, %v859
    %v892 = vsub.f32 1.0, %v860
    %v893 = vsub.f32 1.0, %v861
    %v894 = vsub.f32 1.0, %v862
    %v895 = vsub.f32 1.0, %v863
    %v896 = vsub.f32 1.0, %v864
    %v897 = vsub.f32 1.0, %v865
    %v898 = vsub.f32 1.0, %v866
    %v899 = vsub.f32 1.0, %v867
    %v900 = vsub.f32 1.0, %v868
    %v901 = vsub.f32 1.0, %v869
    %v902 = vsub.f32 1.0, %v870
    %v903 = vsub.f32 1.0, %v871
    %v904 = vsub.f32 1.0, %v872
    %v905 = vsub.f32 1.0, %v873
    %v906 = vsub.f32 1.0, %v874
    %v907 = vsub.f32 1.0, %v875
    %v908 = vmul.f32 %v876, %v346
    %v909 = vmul.f32 %v877, %v375
    %v910 = vmul.f32 %v878, %v404
    %v911 = vmul.f32 %v879, %v433
    %v912 = vmul.f32 %v880, %v462
    %v913 = vmul.f32 %v881, %v491
    %v914 = vmul.f32 %v882, %v520
    %v915 = vmul.f32 %v883, %v549
    %v916 = vmul.f32 %v884, %v349
    %v917 = vmul.f32 %v885, %v378
    %v918 = vmul.f32 %v886, %v407
    %v919 = vmul.f32 %v887, %v436
    %v920 = vmul.f32 %v888, %v465
    %v921 = vmul.f32 %v889, %v494
    %v922 = vmul.f32 %v890, %v523
    %v923 = vmul.f32 %v891, %v552
    %v924 = vmul.f32 %v892, %v352
    %v925 = vmul.f32 %v893, %v381
    %v926 = vmul.f32 %v894, %v410
    %v927 = vmul.f32 %v895, %v439
    %v928 = vmul.f32 %v896, %v468
    %v929 = vmul.f32 %v897, %v497
    %v930 = vmul.f32 %v898, %v526
    %v931 = vmul.f32 %v899, %v555
    %v932 = vmul.f32 %v900, %v355
    %v933 = vmul.f32 %v901, %v384
    %v934 = vmul.f32 %v902, %v413
    %v935 = vmul.f32 %v903, %v442
    %v936 = vmul.f32 %v904, %v471
    %v937 = vmul.f32 %v905, %v500
    %v938 = vmul.f32 %v906, %v529
    %v939 = vmul.f32 %v907, %v558
    %941 = vset.pattern.permute.xlu0 0
    %942 = vperm.xlu0 %941, %v57
    %v943 = vpop.permute.xlu0 %942
    %946 = vset.pattern.permute.xlu0 0
    %947 = vperm.xlu0 %946, %v58
    %v948 = vpop.permute.xlu0 %947
    %951 = vset.pattern.permute.xlu0 0
    %952 = vperm.xlu0 %951, %v59
    %v953 = vpop.permute.xlu0 %952
    %956 = vset.pattern.permute.xlu0 0
    %957 = vperm.xlu0 %956, %v60
    %v958 = vpop.permute.xlu0 %957
    %v960 = vmul.f32 %v812, %v943
    %v961 = vmul.f32 %v813, %v943
    %v962 = vmul.f32 %v814, %v943
    %v963 = vmul.f32 %v815, %v943
    %v964 = vmul.f32 %v816, %v943
    %v965 = vmul.f32 %v817, %v943
    %v966 = vmul.f32 %v818, %v943
    %v967 = vmul.f32 %v819, %v943
    %v968 = vmul.f32 %v820, %v948
    %v969 = vmul.f32 %v821, %v948
    %v970 = vmul.f32 %v822, %v948
    %v971 = vmul.f32 %v823, %v948
    %v972 = vmul.f32 %v824, %v948
    %v973 = vmul.f32 %v825, %v948
    %v974 = vmul.f32 %v826, %v948
    %v975 = vmul.f32 %v827, %v948
    %v976 = vmul.f32 %v828, %v953
    %v977 = vmul.f32 %v829, %v953
    %v978 = vmul.f32 %v830, %v953
    %v979 = vmul.f32 %v831, %v953
    %v980 = vmul.f32 %v832, %v953
    %v981 = vmul.f32 %v833, %v953
    %v982 = vmul.f32 %v834, %v953
    %v983 = vmul.f32 %v835, %v953
    %v984 = vmul.f32 %v836, %v958
    %v985 = vmul.f32 %v837, %v958
    %v986 = vmul.f32 %v838, %v958
    %v987 = vmul.f32 %v839, %v958
    %v988 = vmul.f32 %v840, %v958
    %v989 = vmul.f32 %v841, %v958
    %v990 = vmul.f32 %v842, %v958
    %v991 = vmul.f32 %v843, %v958
    %v992 = vadd.f32 %v960, %v968
    %v993 = vadd.f32 %v992, %v976
    %v994 = vadd.f32 %v993, %v984
    %v995 = vrot.slane %v994, 4
    %v996 = vadd.f32 %v994, %v995
    %v997 = vrot.slane %v996, 2
    %v998 = vadd.f32 %v996, %v997
    %v999 = vrot.slane %v998, 1
    %v1000 = vadd.f32 %v998, %v999
    %v1001 = vadd.f32 %v961, %v969
    %v1002 = vadd.f32 %v1001, %v977
    %v1003 = vadd.f32 %v1002, %v985
    %v1004 = vrot.slane %v1003, 4
    %v1005 = vadd.f32 %v1003, %v1004
    %v1006 = vrot.slane %v1005, 2
    %v1007 = vadd.f32 %v1005, %v1006
    %v1008 = vrot.slane %v1007, 1
    %v1009 = vadd.f32 %v1007, %v1008
    %v1010 = vadd.f32 %v962, %v970
    %v1011 = vadd.f32 %v1010, %v978
    %v1012 = vadd.f32 %v1011, %v986
    %v1013 = vrot.slane %v1012, 4
    %v1014 = vadd.f32 %v1012, %v1013
    %v1015 = vrot.slane %v1014, 2
    %v1016 = vadd.f32 %v1014, %v1015
    %v1017 = vrot.slane %v1016, 1
    %v1018 = vadd.f32 %v1016, %v1017
    %v1019 = vadd.f32 %v963, %v971
    %v1020 = vadd.f32 %v1019, %v979
    %v1021 = vadd.f32 %v1020, %v987
    %v1022 = vrot.slane %v1021, 4
    %v1023 = vadd.f32 %v1021, %v1022
    %v1024 = vrot.slane %v1023, 2
    %v1025 = vadd.f32 %v1023, %v1024
    %v1026 = vrot.slane %v1025, 1
    %v1027 = vadd.f32 %v1025, %v1026
    %v1028 = vadd.f32 %v964, %v972
    %v1029 = vadd.f32 %v1028, %v980
    %v1030 = vadd.f32 %v1029, %v988
    %v1031 = vrot.slane %v1030, 4
    %v1032 = vadd.f32 %v1030, %v1031
    %v1033 = vrot.slane %v1032, 2
    %v1034 = vadd.f32 %v1032, %v1033
    %v1035 = vrot.slane %v1034, 1
    %v1036 = vadd.f32 %v1034, %v1035
    %v1037 = vadd.f32 %v965, %v973
    %v1038 = vadd.f32 %v1037, %v981
    %v1039 = vadd.f32 %v1038, %v989
    %v1040 = vrot.slane %v1039, 4
    %v1041 = vadd.f32 %v1039, %v1040
    %v1042 = vrot.slane %v1041, 2
    %v1043 = vadd.f32 %v1041, %v1042
    %v1044 = vrot.slane %v1043, 1
    %v1045 = vadd.f32 %v1043, %v1044
    %v1046 = vadd.f32 %v966, %v974
    %v1047 = vadd.f32 %v1046, %v982
    %v1048 = vadd.f32 %v1047, %v990
    %v1049 = vrot.slane %v1048, 4
    %v1050 = vadd.f32 %v1048, %v1049
    %v1051 = vrot.slane %v1050, 2
    %v1052 = vadd.f32 %v1050, %v1051
    %v1053 = vrot.slane %v1052, 1
    %v1054 = vadd.f32 %v1052, %v1053
    %v1055 = vadd.f32 %v967, %v975
    %v1056 = vadd.f32 %v1055, %v983
    %v1057 = vadd.f32 %v1056, %v991
    %v1058 = vrot.slane %v1057, 4
    %v1059 = vadd.f32 %v1057, %v1058
    %v1060 = vrot.slane %v1059, 2
    %v1061 = vadd.f32 %v1059, %v1060
    %v1062 = vrot.slane %v1061, 1
    %v1063 = vadd.f32 %v1061, %v1062
    %v1064 = vstv %s61
    %v1065 = vadd.f32 %v1000, %v1064
    %v1066 = vadd.f32 %v1009, %v1064
    %v1067 = vadd.f32 %v1018, %v1064
    %v1068 = vadd.f32 %v1027, %v1064
    %v1069 = vadd.f32 %v1036, %v1064
    %v1070 = vadd.f32 %v1045, %v1064
    %v1071 = vadd.f32 %v1054, %v1064
    %v1072 = vadd.f32 %v1063, %v1064
    %v1073 = vmul.f32 %v908, %v943
    %v1074 = vmul.f32 %v909, %v943
    %v1075 = vmul.f32 %v910, %v943
    %v1076 = vmul.f32 %v911, %v943
    %v1077 = vmul.f32 %v912, %v943
    %v1078 = vmul.f32 %v913, %v943
    %v1079 = vmul.f32 %v914, %v943
    %v1080 = vmul.f32 %v915, %v943
    %v1081 = vmul.f32 %v916, %v948
    %v1082 = vmul.f32 %v917, %v948
    %v1083 = vmul.f32 %v918, %v948
    %v1084 = vmul.f32 %v919, %v948
    %v1085 = vmul.f32 %v920, %v948
    %v1086 = vmul.f32 %v921, %v948
    %v1087 = vmul.f32 %v922, %v948
    %v1088 = vmul.f32 %v923, %v948
    %v1089 = vmul.f32 %v924, %v953
    %v1090 = vmul.f32 %v925, %v953
    %v1091 = vmul.f32 %v926, %v953
    %v1092 = vmul.f32 %v927, %v953
    %v1093 = vmul.f32 %v928, %v953
    %v1094 = vmul.f32 %v929, %v953
    %v1095 = vmul.f32 %v930, %v953
    %v1096 = vmul.f32 %v931, %v953
    %v1097 = vmul.f32 %v932, %v958
    %v1098 = vmul.f32 %v933, %v958
    %v1099 = vmul.f32 %v934, %v958
    %v1100 = vmul.f32 %v935, %v958
    %v1101 = vmul.f32 %v936, %v958
    %v1102 = vmul.f32 %v937, %v958
    %v1103 = vmul.f32 %v938, %v958
    %v1104 = vmul.f32 %v939, %v958
    %v1105 = vadd.f32 %v1073, %v1081
    %v1106 = vadd.f32 %v1105, %v1089
    %v1107 = vadd.f32 %v1106, %v1097
    %v1108 = vrot.slane %v1107, 4
    %v1109 = vadd.f32 %v1107, %v1108
    %v1110 = vrot.slane %v1109, 2
    %v1111 = vadd.f32 %v1109, %v1110
    %v1112 = vrot.slane %v1111, 1
    %v1113 = vadd.f32 %v1111, %v1112
    %v1114 = vadd.f32 %v1074, %v1082
    %v1115 = vadd.f32 %v1114, %v1090
    %v1116 = vadd.f32 %v1115, %v1098
    %v1117 = vrot.slane %v1116, 4
    %v1118 = vadd.f32 %v1116, %v1117
    %v1119 = vrot.slane %v1118, 2
    %v1120 = vadd.f32 %v1118, %v1119
    %v1121 = vrot.slane %v1120, 1
    %v1122 = vadd.f32 %v1120, %v1121
    %v1123 = vadd.f32 %v1075, %v1083
    %v1124 = vadd.f32 %v1123, %v1091
    %v1125 = vadd.f32 %v1124, %v1099
    %v1126 = vrot.slane %v1125, 4
    %v1127 = vadd.f32 %v1125, %v1126
    %v1128 = vrot.slane %v1127, 2
    %v1129 = vadd.f32 %v1127, %v1128
    %v1130 = vrot.slane %v1129, 1
    %v1131 = vadd.f32 %v1129, %v1130
    %v1132 = vadd.f32 %v1076, %v1084
    %v1133 = vadd.f32 %v1132, %v1092
    %v1134 = vadd.f32 %v1133, %v1100
    %v1135 = vrot.slane %v1134, 4
    %v1136 = vadd.f32 %v1134, %v1135
    %v1137 = vrot.slane %v1136, 2
    %v1138 = vadd.f32 %v1136, %v1137
    %v1139 = vrot.slane %v1138, 1
    %v1140 = vadd.f32 %v1138, %v1139
    %v1141 = vadd.f32 %v1077, %v1085
    %v1142 = vadd.f32 %v1141, %v1093
    %v1143 = vadd.f32 %v1142, %v1101
    %v1144 = vrot.slane %v1143, 4
    %v1145 = vadd.f32 %v1143, %v1144
    %v1146 = vrot.slane %v1145, 2
    %v1147 = vadd.f32 %v1145, %v1146
    %v1148 = vrot.slane %v1147, 1
    %v1149 = vadd.f32 %v1147, %v1148
    %v1150 = vadd.f32 %v1078, %v1086
    %v1151 = vadd.f32 %v1150, %v1094
    %v1152 = vadd.f32 %v1151, %v1102
    %v1153 = vrot.slane %v1152, 4
    %v1154 = vadd.f32 %v1152, %v1153
    %v1155 = vrot.slane %v1154, 2
    %v1156 = vadd.f32 %v1154, %v1155
    %v1157 = vrot.slane %v1156, 1
    %v1158 = vadd.f32 %v1156, %v1157
    %v1159 = vadd.f32 %v1079, %v1087
    %v1160 = vadd.f32 %v1159, %v1095
    %v1161 = vadd.f32 %v1160, %v1103
    %v1162 = vrot.slane %v1161, 4
    %v1163 = vadd.f32 %v1161, %v1162
    %v1164 = vrot.slane %v1163, 2
    %v1165 = vadd.f32 %v1163, %v1164
    %v1166 = vrot.slane %v1165, 1
    %v1167 = vadd.f32 %v1165, %v1166
    %v1168 = vadd.f32 %v1080, %v1088
    %v1169 = vadd.f32 %v1168, %v1096
    %v1170 = vadd.f32 %v1169, %v1104
    %v1171 = vrot.slane %v1170, 4
    %v1172 = vadd.f32 %v1170, %v1171
    %v1173 = vrot.slane %v1172, 2
    %v1174 = vadd.f32 %v1172, %v1173
    %v1175 = vrot.slane %v1174, 1
    %v1176 = vadd.f32 %v1174, %v1175
    %v1177 = vmul.f32 %v1065, %v1065
    %v1178 = vmul.f32 %v1066, %v1066
    %v1179 = vmul.f32 %v1067, %v1067
    %v1180 = vmul.f32 %v1068, %v1068
    %v1181 = vmul.f32 %v1069, %v1069
    %v1182 = vmul.f32 %v1070, %v1070
    %v1183 = vmul.f32 %v1071, %v1071
    %v1184 = vmul.f32 %v1072, %v1072
    %v1185 = vmul.f32 %v1177, %v1065
    %v1186 = vmul.f32 %v1178, %v1066
    %v1187 = vmul.f32 %v1179, %v1067
    %v1188 = vmul.f32 %v1180, %v1068
    %v1189 = vmul.f32 %v1181, %v1069
    %v1190 = vmul.f32 %v1182, %v1070
    %v1191 = vmul.f32 %v1183, %v1071
    %v1192 = vmul.f32 %v1184, %v1072
    %v1193 = vstv %s63
    %v1194 = vmul.f32 %v1193, %v1065
    %v1195 = vmul.f32 %v1193, %v1066
    %v1196 = vmul.f32 %v1193, %v1067
    %v1197 = vmul.f32 %v1193, %v1068
    %v1198 = vmul.f32 %v1193, %v1069
    %v1199 = vmul.f32 %v1193, %v1070
    %v1200 = vmul.f32 %v1193, %v1071
    %v1201 = vmul.f32 %v1193, %v1072
    %v1202 = vstv %s62
    %v1203 = vadd.f32 %v1202, %v1194
    %v1204 = vadd.f32 %v1202, %v1195
    %v1205 = vadd.f32 %v1202, %v1196
    %v1206 = vadd.f32 %v1202, %v1197
    %v1207 = vadd.f32 %v1202, %v1198
    %v1208 = vadd.f32 %v1202, %v1199
    %v1209 = vadd.f32 %v1202, %v1200
    %v1210 = vadd.f32 %v1202, %v1201
    %v1211 = vstv %s64
    %v1212 = vmul.f32 %v1211, %v1177
    %v1213 = vmul.f32 %v1211, %v1178
    %v1214 = vmul.f32 %v1211, %v1179
    %v1215 = vmul.f32 %v1211, %v1180
    %v1216 = vmul.f32 %v1211, %v1181
    %v1217 = vmul.f32 %v1211, %v1182
    %v1218 = vmul.f32 %v1211, %v1183
    %v1219 = vmul.f32 %v1211, %v1184
    %v1220 = vadd.f32 %v1203, %v1212
    %v1221 = vadd.f32 %v1204, %v1213
    %v1222 = vadd.f32 %v1205, %v1214
    %v1223 = vadd.f32 %v1206, %v1215
    %v1224 = vadd.f32 %v1207, %v1216
    %v1225 = vadd.f32 %v1208, %v1217
    %v1226 = vadd.f32 %v1209, %v1218
    %v1227 = vadd.f32 %v1210, %v1219
    %v1228 = vstv %s65
    %v1229 = vmul.f32 %v1228, %v1185
    %v1230 = vmul.f32 %v1228, %v1186
    %v1231 = vmul.f32 %v1228, %v1187
    %v1232 = vmul.f32 %v1228, %v1188
    %v1233 = vmul.f32 %v1228, %v1189
    %v1234 = vmul.f32 %v1228, %v1190
    %v1235 = vmul.f32 %v1228, %v1191
    %v1236 = vmul.f32 %v1228, %v1192
    %v1237 = vadd.f32 %v1220, %v1229
    %v1238 = vadd.f32 %v1221, %v1230
    %v1239 = vadd.f32 %v1222, %v1231
    %v1240 = vadd.f32 %v1223, %v1232
    %v1241 = vadd.f32 %v1224, %v1233
    %v1242 = vadd.f32 %v1225, %v1234
    %v1243 = vadd.f32 %v1226, %v1235
    %v1244 = vadd.f32 %v1227, %v1236
    %vm1245 = vcmask 1040384
    %v1246 = vsel %vm1245, 1.0, %v1065
    %v1247 = vsel %vm1245, 1.0, %v1066
    %v1248 = vsel %vm1245, 1.0, %v1067
    %v1249 = vsel %vm1245, 1.0, %v1068
    %v1250 = vsel %vm1245, 1.0, %v1069
    %v1251 = vsel %vm1245, 1.0, %v1070
    %v1252 = vsel %vm1245, 1.0, %v1071
    %v1253 = vsel %vm1245, 1.0, %v1072
    %vm1254 = vcmask 1041408
    %v1255 = vsel %vm1254, %v1246, %v1177
    %v1256 = vsel %vm1254, %v1247, %v1178
    %v1257 = vsel %vm1254, %v1248, %v1179
    %v1258 = vsel %vm1254, %v1249, %v1180
    %v1259 = vsel %vm1254, %v1250, %v1181
    %v1260 = vsel %vm1254, %v1251, %v1182
    %v1261 = vsel %vm1254, %v1252, %v1183
    %v1262 = vsel %vm1254, %v1253, %v1184
    %vm1263 = vcmask 1042432
    %v1264 = vsel %vm1263, %v1255, %v1185
    %v1265 = vsel %vm1263, %v1256, %v1186
    %v1266 = vsel %vm1263, %v1257, %v1187
    %v1267 = vsel %vm1263, %v1258, %v1188
    %v1268 = vsel %vm1263, %v1259, %v1189
    %v1269 = vsel %vm1263, %v1260, %v1190
    %v1270 = vsel %vm1263, %v1261, %v1191
    %v1271 = vsel %vm1263, %v1262, %v1192
    %vm1272 = vcmask 1043456
    %v1273 = vsel %vm1272, %v1264, %v1113
    %v1274 = vsel %vm1272, %v1265, %v1122
    %v1275 = vsel %vm1272, %v1266, %v1131
    %v1276 = vsel %vm1272, %v1267, %v1140
    %v1277 = vsel %vm1272, %v1268, %v1149
    %v1278 = vsel %vm1272, %v1269, %v1158
    %v1279 = vsel %vm1272, %v1270, %v1167
    %v1280 = vsel %vm1272, %v1271, %v1176
    %vm1281 = vcmask 1044480
    %v1282 = vsel %vm1281, %v1273, %v1237
    %v1283 = vsel %vm1281, %v1274, %v1238
    %v1284 = vsel %vm1281, %v1275, %v1239
    %v1285 = vsel %vm1281, %v1276, %v1240
    %v1286 = vsel %vm1281, %v1277, %v1241
    %v1287 = vsel %vm1281, %v1278, %v1242
    %v1288 = vsel %vm1281, %v1279, %v1243
    %v1289 = vsel %vm1281, %v1280, %v1244
    %1290 = vst [vmem:[#allocation5] sm:$0x3f] %v1282
    %1291 = vst [vmem:[#allocation5 + $0x8] sm:$0x3f] %v1283
    %1292 = vst [vmem:[#allocation5 + $0x10] sm:$0x3f] %v1284
    %1293 = vst [vmem:[#allocation5 + $0x18] sm:$0x3f] %v1285
    %1294 = vst [vmem:[#allocation5 + $0x20] sm:$0x3f] %v1286
    %1295 = vst [vmem:[#allocation5 + $0x28] sm:$0x3f] %v1287
    %1296 = vst [vmem:[#allocation5 + $0x30] sm:$0x3f] %v1288
    %1297 = vst [vmem:[#allocation5 + $0x38] sm:$0x3f] %v1289
    // Predicated region
    $region34: #{tpu_custom_call.1} parent=1 // pred_check
      _
    $region35: #{tpu_custom_call.1} parent=1 // pred_check_branch
      %1299 = sbr.rel (0) target = $region37
    $region36: #{tpu_custom_call.1} parent=1 // pred_region
      %1301 = vsyncadd [#allocation3], 0
      %s1303 = sshll.u32 [#allocation5], 4
      %s1304 = int_to_ptr.vmem [resolvable:$true] %s1303
      %s1305 = sshll.u32 %s7, 4
      %s1306 = int_to_ptr.hbm [resolvable:$true] %s1305
      %1308 = dma.vmem_to_hbm [thread:$0]  %s1304, 1024, %s1306, [#allocation3]
    $region37: #{tpu_custom_call.1} parent=1 // pred_fallthru
      _
    // Predicated region
    $region38: #{tpu_custom_call.1} parent=1 // pred_check
      _
    $region39: #{tpu_custom_call.1} parent=1 // pred_check_branch
      %1310 = sbr.rel (0) target = $region41
    $region40: #{tpu_custom_call.1} parent=1 // pred_region
      %1312 = dma.done [#allocation3], 1024
    $region41: #{tpu_custom_call.1} parent=1 // pred_fallthru
      _
    %1313 = vsyncpa [#allocation3], 1
    %1314 = vsyncpa [#allocation4], 1

</llo_original>
